<compile_context>
chip_gen: v7x
topology: tpu7x:2x2x1
jax: 0.10.0
libtpu: 0.0.40
codegen_flags: <defaults>
</compile_context>

<pallas_src>
import inspect

import jax
import jax.numpy as jnp
from jax import lax
from jax.experimental import pallas as pl
from jax.experimental.pallas import tpu as pltpu  # noqa: F401  (kept for TPU-specific tuning)


def _diffusion_deg_kernel(l_ref, deg_ref, dt_ref, fts_ref, ew_ref, out_ref):
    """Build the channel-packed A, Gauss-Jordan solve the W systems, LeakyReLU, lane-dense store.

    Layout (channel index packed into the lane dimension, lane = col*W + chan):
      l_ref   (N, N)     graph operator L*
      deg_ref (N, 1)     node degree vector (must be > 0)
      dt_ref  (1, W)     per-channel diffusion time (clamped in-kernel)
      fts_ref (N, W)     node features (right-hand sides, one column per channel)
      ew_ref  (W, N*W)   static channel-expansion operator: Ew[w, j*W + w'] = (w == w')
      out_ref (1, N*W)   LeakyReLU(A^{-1} b), out[0, i*W + w] = x[i, w]
    """
    N = l_ref.shape[0]
    W = dt_ref.shape[1]
    NW = N * W
    f32 = jnp.float32

    def recip(x):
        # EUP approximate reciprocal + one Newton-Raphson step (~full f32 accuracy).
        r = pl.reciprocal(x, approx=True)
        return r * (2.0 - x * r)

    Ew = ew_ref[...]                                   # (W, NW) lane-tiling operator
    L = l_ref[...]                                     # (N, N)
    deg_inv = recip(deg_ref[...])                      # (N, 1)  requires deg > 0
    dt = jnp.maximum(dt_ref[...], 1e-8)                # (1, W)  torch no_grad clamp
    B = fts_ref[...]                                   # (N, W)  right-hand sides

    # Packed identity / column-repeat operator: Epr[i, j*W + w] = (i == j)  (built from iota,
    # no persistent identity input; compare-only, no integer div/mod).
    lane = lax.broadcasted_iota(jnp.int32, (N, NW), 1)
    row = lax.broadcasted_iota(jnp.int32, (N, NW), 0)
    rW = row * W
    Epr = ((lane >= rW) & (lane < rW + W)).astype(f32)            # (N, NW)

    # A[i, j*W + w] = delta_ij - dt[w] * deg_inv[i] * L[i, j]  (single broadcast-FMA, packed).
    scale = deg_inv * dt                                          # (N, W)   dt folded with 1/deg
    scale_rep = jnp.dot(scale, Ew, preferred_element_type=f32)    # (N, NW)  MXU lane-tile
    L_rep = jnp.dot(L, Epr, preferred_element_type=f32)           # (N, NW)  L repeated per channel
    A = Epr - scale_rep * L_rep                                   # (N, NW)

    row_w = lax.broadcasted_iota(jnp.int32, (N, W), 0)            # hoisted; e_k = (row_w == k)

    # Fully-unrolled, pivot-free Gauss-Jordan on the W packed systems.  k is a static Python int,
    # so every slice below is a static sublane- or lane-slice; each elimination step is one
    # full-width (N, 128)-lane VPU FMA plus one tiny MXU lane-tile of the multipliers.
    # TODO(synk): for N > ~64 switch to lax.fori_loop (+ pl.ds slicing) to bound vreg live
    # ranges, and for N >= a few hundred replace with a blocked MXU LU (128-wide panels on v5e,
    # 256-wide on v6e/v7x) with the W channels split across the two v7x TensorCores.
    for k in range(N):
        prow = A[k:k + 1, :]                           # (1, NW) pivot row        (sublane slice)
        pb = B[k:k + 1, :]                             # (1, W)  pivot RHS
        pval = prow[:, k * W:(k + 1) * W]              # (1, W)  per-channel pivots (lane slice)
        inv_p = recip(pval)                            # (1, W)  approx + Newton refinement
        ek = (row_w == k).astype(f32)                  # (N, W)  one-hot row k, regenerated (cheap)
        m = (A[:, k * W:(k + 1) * W] - ek) * inv_p     # (N, W)  multipliers; row k -> (p-1)/p
        m_rep = jnp.dot(m, Ew, preferred_element_type=f32)   # (N, NW) lane-tiled multipliers (MXU)
        A = A - m_rep * prow                           # rows i != k eliminated, row k normalized
        B = B - m * pb                                 # same update on the RHS

    x = jnp.where(B >= 0, B, 0.01 * B)                 # (N, W)  LeakyReLU (torch default 0.01)

    # Lane-dense store: out[0, i*W + w] = x[i, w]  ->  one unmasked full-width (1, 128) store.
    x_rep = jnp.dot(x, Ew, preferred_element_type=f32)            # x_rep[i, j*W+w] = x[i, w]
    ones_row = jnp.ones((1, N), f32)
    out_ref[...] = jnp.dot(ones_row, Epr * x_rep, preferred_element_type=f32)


def diffusion_layer_deg_operators_forward(
        node_fts, node_deg_vec, node_deg_mat, operator, k_eig_val, k_eig_vec,
        num_nodes, batch_idx, *, diffusion_time, alpha, gamma_diff, gamma_adv):
    """JAX/Pallas equivalent of Diffusion_layer_DegOperators.forward."""
    del node_deg_mat, k_eig_val, k_eig_vec, batch_idx  # unused by this module's forward

    sig = inspect.signature(operator)
    num_params = len(sig.parameters)
    if num_params == 1:
        L_star = operator(alpha)
    elif num_params == 3:
        L_star = operator(gamma_adv, gamma_diff, alpha)
    else:
        raise ValueError(
            "The operator function must take either 1 argument (alpha) or "
            "3 arguments (gamma_adv, gamma_diff, alpha).")

    N = int(num_nodes)
    W = int(diffusion_time.shape[0])
    NW = N * W
    f32 = jnp.float32

    # 2-D, lane-friendly host-side layouts (reshapes only -- no transposes).
    L2 = jnp.asarray(L_star, f32).reshape(N, N)
    deg2 = jnp.asarray(node_deg_vec, f32).reshape(N, 1)
    dt2 = jnp.asarray(diffusion_time, f32).reshape(1, W)
    fts2 = jnp.asarray(node_fts, f32).reshape(N, W)

    # Static channel-expansion operator Ew[w, j*W + w'] = (w == w'): lane-tiles a (., W) tensor to
    # (., N*W) with one small MXU matmul in-kernel (also keeps integer mod off the TensorCore).
    ew = (jnp.arange(NW, dtype=jnp.int32)[None, :] % W
          == jnp.arange(W, dtype=jnp.int32)[:, None]).astype(f32)

    # TODO(synk): when this layer runs over a batch of graphs / parameter sets, add a leading grid
    # dimension (one graph per grid step, dimension_semantics=("parallel",)) so BlockSpec
    # pipelining prefetches the next graph's L/fts and the two v7x TensorCores split the batch.
    out = pl.pallas_call(
        _diffusion_deg_kernel,
        out_shape=jax.ShapeDtypeStruct((1, NW), f32),
        in_specs=[
            pl.BlockSpec((N, N), lambda: (0, 0)),
            pl.BlockSpec((N, 1), lambda: (0, 0)),
            pl.BlockSpec((1, W), lambda: (0, 0)),
            pl.BlockSpec((N, W), lambda: (0, 0)),
            pl.BlockSpec((W, NW), lambda: (0, 0)),
        ],
        out_specs=pl.BlockSpec((1, NW), lambda: (0, 0)),
    )(L2, deg2, dt2, fts2, ew)

    # (1, N*W) -> (N, W) is layout-preserving (W innermost), so this reshape is free.
    return out.reshape(N, W)


if __name__ == "__main__":
    key = jax.random.PRNGKey(0)
    N = 16   # num_nodes
    W = 8    # width
    K = 4    # k eigenpairs (unused by forward)

    k1, k2 = jax.random.split(key)
    node_fts = jax.random.normal(k1, (N, W), dtype=jnp.float32)

    # deterministic random symmetric graph -> degrees and Laplacian
    adj_raw = (jax.random.uniform(k2, (N, N)) > 0.6).astype(jnp.float32)
    adj = jnp.maximum(adj_raw, adj_raw.T) * (1.0 - jnp.eye(N, dtype=jnp.float32))
    deg = jnp.sum(adj, axis=1) + 1.0                 # strictly positive degrees
    node_deg_vec = deg[:, None]                      # (N, 1)
    node_deg_mat = jnp.diag(deg)                     # (N, N), unused by forward
    L_graph = jnp.diag(deg) - adj                    # graph Laplacian

    k_eig_val = jnp.zeros((K,), jnp.float32)         # unused by forward
    k_eig_vec = jnp.zeros((N, K), jnp.float32)       # unused by forward
    batch_idx = jnp.zeros((N,), jnp.int32)           # unused by forward

    def operator(alpha):                             # 1-arg operator path
        return alpha * L_graph

    alpha_0, gamma_diff_0, gamma_adv_0 = 1.0, 1.0, 0.5
    # nn.init.constant_(self.diffusion_time, 0.0)  (clamped to 1e-8 in forward)
    diffusion_time = jnp.zeros((W,), jnp.float32)

    out = diffusion_layer_deg_operators_forward(
        node_fts, node_deg_vec, node_deg_mat, operator, k_eig_val, k_eig_vec,
        N, batch_idx, diffusion_time=diffusion_time,
        alpha=alpha_0, gamma_diff=gamma_diff_0, gamma_adv=gamma_adv_0)
    out = jax.block_until_ready(out)
    assert out.shape == (N, W) and out.dtype == jnp.float32

    # plain-JAX reference (mirrors the torch forward) for validation
    def reference(fts, dvec, L_star, dt):
        dt = jnp.maximum(dt, 1e-8)
        DinvL = (1.0 / dvec[:, 0])[:, None] * L_star
        A = jnp.eye(N, dtype=jnp.float32)[None] - dt[:, None, None] * DinvL[None]
        rhs = fts.T[:, :, None]
        x = jnp.linalg.solve(A, rhs)[..., 0].T
        return jnp.where(x >= 0, x, 0.01 * x)

    ref0 = reference(node_fts, node_deg_vec, operator(alpha_0), diffusion_time)
    assert jnp.allclose(out, ref0, atol=1e-4), "mismatch vs reference (init dt)"

    # also exercise the in-kernel solve with non-trivial diffusion times
    dt_nz = 0.05 + 0.25 * jax.random.uniform(jax.random.PRNGKey(1), (W,), dtype=jnp.float32)
    out_nz = jax.block_until_ready(diffusion_layer_deg_operators_forward(
        node_fts, node_deg_vec, node_deg_mat, operator, k_eig_val, k_eig_vec,
        N, batch_idx, diffusion_time=dt_nz,
        alpha=alpha_0, gamma_diff=gamma_diff_0, gamma_adv=gamma_adv_0))
    ref_nz = reference(node_fts, node_deg_vec, operator(alpha_0), dt_nz)
    assert jnp.allclose(out_nz, ref_nz, atol=1e-3), "mismatch vs reference (dt > 0)"

    print("KERNEL_OK")
</pallas_src>

<mosaic_0001>
module attributes {stable_mosaic.version = 11 : i64} {
  func.func @_diffusion_deg_kernel(%arg0: memref<16x16xf32, #tpu.memory_space<vmem>>, %arg1: memref<16x1xf32, #tpu.memory_space<vmem>>, %arg2: memref<1x8xf32, #tpu.memory_space<vmem>>, %arg3: memref<16x8xf32, #tpu.memory_space<vmem>>, %arg4: memref<8x128xf32, #tpu.memory_space<vmem>>, %arg5: memref<1x128xf32, #tpu.memory_space<vmem>>) attributes {dimension_semantics = [], scalar_prefetch = 0 : i64, scratch_operands = 0 : i64, tpu.core_type = #tpu.core_type<tc>} {
    %c0 = arith.constant 0 : index
    %c0_0 = arith.constant 0 : index
    %0 = vector.load %arg4[%c0, %c0_0] : memref<8x128xf32, #tpu.memory_space<vmem>>, vector<8x128xf32>
    %c0_1 = arith.constant 0 : index
    %c0_2 = arith.constant 0 : index
    %1 = vector.load %arg0[%c0_1, %c0_2] : memref<16x16xf32, #tpu.memory_space<vmem>>, vector<16x16xf32>
    %c0_3 = arith.constant 0 : index
    %c0_4 = arith.constant 0 : index
    %2 = vector.load %arg1[%c0_3, %c0_4] : memref<16x1xf32, #tpu.memory_space<vmem>>, vector<16x1xf32>
    %3 = tpu.reciprocal %2 {approx = true} : vector<16x1xf32> -> vector<16x1xf32>
    %4 = arith.mulf %2, %3 : vector<16x1xf32>
    %cst = arith.constant 2.000000e+00 : f32
    %5 = vector.broadcast %cst : f32 to vector<16x1xf32>
    %6 = arith.subf %5, %4 : vector<16x1xf32>
    %7 = arith.mulf %3, %6 : vector<16x1xf32>
    %c0_5 = arith.constant 0 : index
    %c0_6 = arith.constant 0 : index
    %8 = vector.load %arg2[%c0_5, %c0_6] : memref<1x8xf32, #tpu.memory_space<vmem>>, vector<1x8xf32>
    %cst_7 = arith.constant 9.99999993E-9 : f32
    %9 = vector.broadcast %cst_7 : f32 to vector<1x8xf32>
    %10 = arith.maximumf %8, %9 : vector<1x8xf32>
    %c0_8 = arith.constant 0 : index
    %c0_9 = arith.constant 0 : index
    %11 = vector.load %arg3[%c0_8, %c0_9] : memref<16x8xf32, #tpu.memory_space<vmem>>, vector<16x8xf32>
    %12 = tpu.iota {dimensions = array<i32: 1>} : vector<16x128xi32>
    %13 = tpu.iota {dimensions = array<i32: 0>} : vector<16x128xi32>
    %c8_i32 = arith.constant 8 : i32
    %14 = vector.broadcast %c8_i32 : i32 to vector<16x128xi32>
    %15 = arith.muli %13, %14 : vector<16x128xi32>
    %16 = arith.cmpi sge, %12, %15 : vector<16x128xi32>
    %c8_i32_10 = arith.constant 8 : i32
    %17 = vector.broadcast %c8_i32_10 : i32 to vector<16x128xi32>
    %18 = arith.addi %15, %17 : vector<16x128xi32>
    %19 = arith.cmpi slt, %12, %18 : vector<16x128xi32>
    %20 = arith.andi %16, %19 : vector<16x128xi1>
    %21 = arith.extui %20 : vector<16x128xi1> to vector<16x128xi32>
    %22 = arith.sitofp %21 : vector<16x128xi32> to vector<16x128xf32>
    %23 = vector.broadcast %7 : vector<16x1xf32> to vector<16x8xf32>
    %24 = vector.broadcast %10 : vector<1x8xf32> to vector<16x8xf32>
    %25 = arith.mulf %23, %24 : vector<16x8xf32>
    %cst_11 = arith.constant dense<0.000000e+00> : vector<16x128xf32>
    %26 = tpu.matmul %25, %0, %cst_11 {dimension_numbers = #tpu.dot_dimension_numbers<[1], [0], [0], [1], [0, 0, 1, 1], [], []>} : vector<16x8xf32>, vector<8x128xf32>, vector<16x128xf32> -> vector<16x128xf32>
    %cst_12 = arith.constant dense<0.000000e+00> : vector<16x128xf32>
    %27 = tpu.matmul %1, %22, %cst_12 {dimension_numbers = #tpu.dot_dimension_numbers<[1], [0], [0], [1], [0, 0, 1, 1], [], []>} : vector<16x16xf32>, vector<16x128xf32>, vector<16x128xf32> -> vector<16x128xf32>
    %28 = arith.mulf %26, %27 : vector<16x128xf32>
    %29 = arith.subf %22, %28 : vector<16x128xf32>
    %30 = tpu.iota {dimensions = array<i32: 0>} : vector<16x8xi32>
    %31 = vector.extract_strided_slice %29 {offsets = [0, 0], sizes = [1, 128], strides = [1, 1]} : vector<16x128xf32> to vector<1x128xf32>
    %32 = vector.extract_strided_slice %11 {offsets = [0, 0], sizes = [1, 8], strides = [1, 1]} : vector<16x8xf32> to vector<1x8xf32>
    %33 = vector.extract_strided_slice %31 {offsets = [0, 0], sizes = [1, 8], strides = [1, 1]} : vector<1x128xf32> to vector<1x8xf32>
    %34 = tpu.reciprocal %33 {approx = true} : vector<1x8xf32> -> vector<1x8xf32>
    %35 = arith.mulf %33, %34 : vector<1x8xf32>
    %cst_13 = arith.constant 2.000000e+00 : f32
    %36 = vector.broadcast %cst_13 : f32 to vector<1x8xf32>
    %37 = arith.subf %36, %35 : vector<1x8xf32>
    %38 = arith.mulf %34, %37 : vector<1x8xf32>
    %c0_i32 = arith.constant 0 : i32
    %39 = vector.broadcast %c0_i32 : i32 to vector<16x8xi32>
    %40 = arith.cmpi eq, %30, %39 : vector<16x8xi32>
    %41 = arith.extui %40 : vector<16x8xi1> to vector<16x8xi32>
    %42 = arith.sitofp %41 : vector<16x8xi32> to vector<16x8xf32>
    %43 = vector.extract_strided_slice %29 {offsets = [0, 0], sizes = [16, 8], strides = [1, 1]} : vector<16x128xf32> to vector<16x8xf32>
    %44 = arith.subf %43, %42 : vector<16x8xf32>
    %45 = vector.broadcast %38 : vector<1x8xf32> to vector<16x8xf32>
    %46 = arith.mulf %44, %45 : vector<16x8xf32>
    %cst_14 = arith.constant dense<0.000000e+00> : vector<16x128xf32>
    %47 = tpu.matmul %46, %0, %cst_14 {dimension_numbers = #tpu.dot_dimension_numbers<[1], [0], [0], [1], [0, 0, 1, 1], [], []>} : vector<16x8xf32>, vector<8x128xf32>, vector<16x128xf32> -> vector<16x128xf32>
    %48 = vector.broadcast %31 : vector<1x128xf32> to vector<16x128xf32>
    %49 = arith.mulf %47, %48 : vector<16x128xf32>
    %50 = arith.subf %29, %49 : vector<16x128xf32>
    %51 = vector.broadcast %32 : vector<1x8xf32> to vector<16x8xf32>
    %52 = arith.mulf %46, %51 : vector<16x8xf32>
    %53 = arith.subf %11, %52 : vector<16x8xf32>
    %54 = vector.extract_strided_slice %50 {offsets = [1, 0], sizes = [1, 128], strides = [1, 1]} : vector<16x128xf32> to vector<1x128xf32>
    %55 = vector.extract_strided_slice %53 {offsets = [1, 0], sizes = [1, 8], strides = [1, 1]} : vector<16x8xf32> to vector<1x8xf32>
    %56 = vector.extract_strided_slice %54 {offsets = [0, 8], sizes = [1, 8], strides = [1, 1]} : vector<1x128xf32> to vector<1x8xf32>
    %57 = tpu.reciprocal %56 {approx = true} : vector<1x8xf32> -> vector<1x8xf32>
    %58 = arith.mulf %56, %57 : vector<1x8xf32>
    %cst_15 = arith.constant 2.000000e+00 : f32
    %59 = vector.broadcast %cst_15 : f32 to vector<1x8xf32>
    %60 = arith.subf %59, %58 : vector<1x8xf32>
    %61 = arith.mulf %57, %60 : vector<1x8xf32>
    %c1_i32 = arith.constant 1 : i32
    %62 = vector.broadcast %c1_i32 : i32 to vector<16x8xi32>
    %63 = arith.cmpi eq, %30, %62 : vector<16x8xi32>
    %64 = arith.extui %63 : vector<16x8xi1> to vector<16x8xi32>
    %65 = arith.sitofp %64 : vector<16x8xi32> to vector<16x8xf32>
    %66 = vector.extract_strided_slice %50 {offsets = [0, 8], sizes = [16, 8], strides = [1, 1]} : vector<16x128xf32> to vector<16x8xf32>
    %67 = arith.subf %66, %65 : vector<16x8xf32>
    %68 = vector.broadcast %61 : vector<1x8xf32> to vector<16x8xf32>
    %69 = arith.mulf %67, %68 : vector<16x8xf32>
    %cst_16 = arith.constant dense<0.000000e+00> : vector<16x128xf32>
    %70 = tpu.matmul %69, %0, %cst_16 {dimension_numbers = #tpu.dot_dimension_numbers<[1], [0], [0], [1], [0, 0, 1, 1], [], []>} : vector<16x8xf32>, vector<8x128xf32>, vector<16x128xf32> -> vector<16x128xf32>
    %71 = vector.broadcast %54 : vector<1x128xf32> to vector<16x128xf32>
    %72 = arith.mulf %70, %71 : vector<16x128xf32>
    %73 = arith.subf %50, %72 : vector<16x128xf32>
    %74 = vector.broadcast %55 : vector<1x8xf32> to vector<16x8xf32>
    %75 = arith.mulf %69, %74 : vector<16x8xf32>
    %76 = arith.subf %53, %75 : vector<16x8xf32>
    %77 = vector.extract_strided_slice %73 {offsets = [2, 0], sizes = [1, 128], strides = [1, 1]} : vector<16x128xf32> to vector<1x128xf32>
    %78 = vector.extract_strided_slice %76 {offsets = [2, 0], sizes = [1, 8], strides = [1, 1]} : vector<16x8xf32> to vector<1x8xf32>
    %79 = vector.extract_strided_slice %77 {offsets = [0, 16], sizes = [1, 8], strides = [1, 1]} : vector<1x128xf32> to vector<1x8xf32>
    %80 = tpu.reciprocal %79 {approx = true} : vector<1x8xf32> -> vector<1x8xf32>
    %81 = arith.mulf %79, %80 : vector<1x8xf32>
    %cst_17 = arith.constant 2.000000e+00 : f32
    %82 = vector.broadcast %cst_17 : f32 to vector<1x8xf32>
    %83 = arith.subf %82, %81 : vector<1x8xf32>
    %84 = arith.mulf %80, %83 : vector<1x8xf32>
    %c2_i32 = arith.constant 2 : i32
    %85 = vector.broadcast %c2_i32 : i32 to vector<16x8xi32>
    %86 = arith.cmpi eq, %30, %85 : vector<16x8xi32>
    %87 = arith.extui %86 : vector<16x8xi1> to vector<16x8xi32>
    %88 = arith.sitofp %87 : vector<16x8xi32> to vector<16x8xf32>
    %89 = vector.extract_strided_slice %73 {offsets = [0, 16], sizes = [16, 8], strides = [1, 1]} : vector<16x128xf32> to vector<16x8xf32>
    %90 = arith.subf %89, %88 : vector<16x8xf32>
    %91 = vector.broadcast %84 : vector<1x8xf32> to vector<16x8xf32>
    %92 = arith.mulf %90, %91 : vector<16x8xf32>
    %cst_18 = arith.constant dense<0.000000e+00> : vector<16x128xf32>
    %93 = tpu.matmul %92, %0, %cst_18 {dimension_numbers = #tpu.dot_dimension_numbers<[1], [0], [0], [1], [0, 0, 1, 1], [], []>} : vector<16x8xf32>, vector<8x128xf32>, vector<16x128xf32> -> vector<16x128xf32>
    %94 = vector.broadcast %77 : vector<1x128xf32> to vector<16x128xf32>
    %95 = arith.mulf %93, %94 : vector<16x128xf32>
    %96 = arith.subf %73, %95 : vector<16x128xf32>
    %97 = vector.broadcast %78 : vector<1x8xf32> to vector<16x8xf32>
    %98 = arith.mulf %92, %97 : vector<16x8xf32>
    %99 = arith.subf %76, %98 : vector<16x8xf32>
    %100 = vector.extract_strided_slice %96 {offsets = [3, 0], sizes = [1, 128], strides = [1, 1]} : vector<16x128xf32> to vector<1x128xf32>
    %101 = vector.extract_strided_slice %99 {offsets = [3, 0], sizes = [1, 8], strides = [1, 1]} : vector<16x8xf32> to vector<1x8xf32>
    %102 = vector.extract_strided_slice %100 {offsets = [0, 24], sizes = [1, 8], strides = [1, 1]} : vector<1x128xf32> to vector<1x8xf32>
    %103 = tpu.reciprocal %102 {approx = true} : vector<1x8xf32> -> vector<1x8xf32>
    %104 = arith.mulf %102, %103 : vector<1x8xf32>
    %cst_19 = arith.constant 2.000000e+00 : f32
    %105 = vector.broadcast %cst_19 : f32 to vector<1x8xf32>
    %106 = arith.subf %105, %104 : vector<1x8xf32>
    %107 = arith.mulf %103, %106 : vector<1x8xf32>
    %c3_i32 = arith.constant 3 : i32
    %108 = vector.broadcast %c3_i32 : i32 to vector<16x8xi32>
    %109 = arith.cmpi eq, %30, %108 : vector<16x8xi32>
    %110 = arith.extui %109 : vector<16x8xi1> to vector<16x8xi32>
    %111 = arith.sitofp %110 : vector<16x8xi32> to vector<16x8xf32>
    %112 = vector.extract_strided_slice %96 {offsets = [0, 24], sizes = [16, 8], strides = [1, 1]} : vector<16x128xf32> to vector<16x8xf32>
    %113 = arith.subf %112, %111 : vector<16x8xf32>
    %114 = vector.broadcast %107 : vector<1x8xf32> to vector<16x8xf32>
    %115 = arith.mulf %113, %114 : vector<16x8xf32>
    %cst_20 = arith.constant dense<0.000000e+00> : vector<16x128xf32>
    %116 = tpu.matmul %115, %0, %cst_20 {dimension_numbers = #tpu.dot_dimension_numbers<[1], [0], [0], [1], [0, 0, 1, 1], [], []>} : vector<16x8xf32>, vector<8x128xf32>, vector<16x128xf32> -> vector<16x128xf32>
    %117 = vector.broadcast %100 : vector<1x128xf32> to vector<16x128xf32>
    %118 = arith.mulf %116, %117 : vector<16x128xf32>
    %119 = arith.subf %96, %118 : vector<16x128xf32>
    %120 = vector.broadcast %101 : vector<1x8xf32> to vector<16x8xf32>
    %121 = arith.mulf %115, %120 : vector<16x8xf32>
    %122 = arith.subf %99, %121 : vector<16x8xf32>
    %123 = vector.extract_strided_slice %119 {offsets = [4, 0], sizes = [1, 128], strides = [1, 1]} : vector<16x128xf32> to vector<1x128xf32>
    %124 = vector.extract_strided_slice %122 {offsets = [4, 0], sizes = [1, 8], strides = [1, 1]} : vector<16x8xf32> to vector<1x8xf32>
    %125 = vector.extract_strided_slice %123 {offsets = [0, 32], sizes = [1, 8], strides = [1, 1]} : vector<1x128xf32> to vector<1x8xf32>
    %126 = tpu.reciprocal %125 {approx = true} : vector<1x8xf32> -> vector<1x8xf32>
    %127 = arith.mulf %125, %126 : vector<1x8xf32>
    %cst_21 = arith.constant 2.000000e+00 : f32
    %128 = vector.broadcast %cst_21 : f32 to vector<1x8xf32>
    %129 = arith.subf %128, %127 : vector<1x8xf32>
    %130 = arith.mulf %126, %129 : vector<1x8xf32>
    %c4_i32 = arith.constant 4 : i32
    %131 = vector.broadcast %c4_i32 : i32 to vector<16x8xi32>
    %132 = arith.cmpi eq, %30, %131 : vector<16x8xi32>
    %133 = arith.extui %132 : vector<16x8xi1> to vector<16x8xi32>
    %134 = arith.sitofp %133 : vector<16x8xi32> to vector<16x8xf32>
    %135 = vector.extract_strided_slice %119 {offsets = [0, 32], sizes = [16, 8], strides = [1, 1]} : vector<16x128xf32> to vector<16x8xf32>
    %136 = arith.subf %135, %134 : vector<16x8xf32>
    %137 = vector.broadcast %130 : vector<1x8xf32> to vector<16x8xf32>
    %138 = arith.mulf %136, %137 : vector<16x8xf32>
    %cst_22 = arith.constant dense<0.000000e+00> : vector<16x128xf32>
    %139 = tpu.matmul %138, %0, %cst_22 {dimension_numbers = #tpu.dot_dimension_numbers<[1], [0], [0], [1], [0, 0, 1, 1], [], []>} : vector<16x8xf32>, vector<8x128xf32>, vector<16x128xf32> -> vector<16x128xf32>
    %140 = vector.broadcast %123 : vector<1x128xf32> to vector<16x128xf32>
    %141 = arith.mulf %139, %140 : vector<16x128xf32>
    %142 = arith.subf %119, %141 : vector<16x128xf32>
    %143 = vector.broadcast %124 : vector<1x8xf32> to vector<16x8xf32>
    %144 = arith.mulf %138, %143 : vector<16x8xf32>
    %145 = arith.subf %122, %144 : vector<16x8xf32>
    %146 = vector.extract_strided_slice %142 {offsets = [5, 0], sizes = [1, 128], strides = [1, 1]} : vector<16x128xf32> to vector<1x128xf32>
    %147 = vector.extract_strided_slice %145 {offsets = [5, 0], sizes = [1, 8], strides = [1, 1]} : vector<16x8xf32> to vector<1x8xf32>
    %148 = vector.extract_strided_slice %146 {offsets = [0, 40], sizes = [1, 8], strides = [1, 1]} : vector<1x128xf32> to vector<1x8xf32>
    %149 = tpu.reciprocal %148 {approx = true} : vector<1x8xf32> -> vector<1x8xf32>
    %150 = arith.mulf %148, %149 : vector<1x8xf32>
    %cst_23 = arith.constant 2.000000e+00 : f32
    %151 = vector.broadcast %cst_23 : f32 to vector<1x8xf32>
    %152 = arith.subf %151, %150 : vector<1x8xf32>
    %153 = arith.mulf %149, %152 : vector<1x8xf32>
    %c5_i32 = arith.constant 5 : i32
    %154 = vector.broadcast %c5_i32 : i32 to vector<16x8xi32>
    %155 = arith.cmpi eq, %30, %154 : vector<16x8xi32>
    %156 = arith.extui %155 : vector<16x8xi1> to vector<16x8xi32>
    %157 = arith.sitofp %156 : vector<16x8xi32> to vector<16x8xf32>
    %158 = vector.extract_strided_slice %142 {offsets = [0, 40], sizes = [16, 8], strides = [1, 1]} : vector<16x128xf32> to vector<16x8xf32>
    %159 = arith.subf %158, %157 : vector<16x8xf32>
    %160 = vector.broadcast %153 : vector<1x8xf32> to vector<16x8xf32>
    %161 = arith.mulf %159, %160 : vector<16x8xf32>
    %cst_24 = arith.constant dense<0.000000e+00> : vector<16x128xf32>
    %162 = tpu.matmul %161, %0, %cst_24 {dimension_numbers = #tpu.dot_dimension_numbers<[1], [0], [0], [1], [0, 0, 1, 1], [], []>} : vector<16x8xf32>, vector<8x128xf32>, vector<16x128xf32> -> vector<16x128xf32>
    %163 = vector.broadcast %146 : vector<1x128xf32> to vector<16x128xf32>
    %164 = arith.mulf %162, %163 : vector<16x128xf32>
    %165 = arith.subf %142, %164 : vector<16x128xf32>
    %166 = vector.broadcast %147 : vector<1x8xf32> to vector<16x8xf32>
    %167 = arith.mulf %161, %166 : vector<16x8xf32>
    %168 = arith.subf %145, %167 : vector<16x8xf32>
    %169 = vector.extract_strided_slice %165 {offsets = [6, 0], sizes = [1, 128], strides = [1, 1]} : vector<16x128xf32> to vector<1x128xf32>
    %170 = vector.extract_strided_slice %168 {offsets = [6, 0], sizes = [1, 8], strides = [1, 1]} : vector<16x8xf32> to vector<1x8xf32>
    %171 = vector.extract_strided_slice %169 {offsets = [0, 48], sizes = [1, 8], strides = [1, 1]} : vector<1x128xf32> to vector<1x8xf32>
    %172 = tpu.reciprocal %171 {approx = true} : vector<1x8xf32> -> vector<1x8xf32>
    %173 = arith.mulf %171, %172 : vector<1x8xf32>
    %cst_25 = arith.constant 2.000000e+00 : f32
    %174 = vector.broadcast %cst_25 : f32 to vector<1x8xf32>
    %175 = arith.subf %174, %173 : vector<1x8xf32>
    %176 = arith.mulf %172, %175 : vector<1x8xf32>
    %c6_i32 = arith.constant 6 : i32
    %177 = vector.broadcast %c6_i32 : i32 to vector<16x8xi32>
    %178 = arith.cmpi eq, %30, %177 : vector<16x8xi32>
    %179 = arith.extui %178 : vector<16x8xi1> to vector<16x8xi32>
    %180 = arith.sitofp %179 : vector<16x8xi32> to vector<16x8xf32>
    %181 = vector.extract_strided_slice %165 {offsets = [0, 48], sizes = [16, 8], strides = [1, 1]} : vector<16x128xf32> to vector<16x8xf32>
    %182 = arith.subf %181, %180 : vector<16x8xf32>
    %183 = vector.broadcast %176 : vector<1x8xf32> to vector<16x8xf32>
    %184 = arith.mulf %182, %183 : vector<16x8xf32>
    %cst_26 = arith.constant dense<0.000000e+00> : vector<16x128xf32>
    %185 = tpu.matmul %184, %0, %cst_26 {dimension_numbers = #tpu.dot_dimension_numbers<[1], [0], [0], [1], [0, 0, 1, 1], [], []>} : vector<16x8xf32>, vector<8x128xf32>, vector<16x128xf32> -> vector<16x128xf32>
    %186 = vector.broadcast %169 : vector<1x128xf32> to vector<16x128xf32>
    %187 = arith.mulf %185, %186 : vector<16x128xf32>
    %188 = arith.subf %165, %187 : vector<16x128xf32>
    %189 = vector.broadcast %170 : vector<1x8xf32> to vector<16x8xf32>
    %190 = arith.mulf %184, %189 : vector<16x8xf32>
    %191 = arith.subf %168, %190 : vector<16x8xf32>
    %192 = vector.extract_strided_slice %188 {offsets = [7, 0], sizes = [1, 128], strides = [1, 1]} : vector<16x128xf32> to vector<1x128xf32>
    %193 = vector.extract_strided_slice %191 {offsets = [7, 0], sizes = [1, 8], strides = [1, 1]} : vector<16x8xf32> to vector<1x8xf32>
    %194 = vector.extract_strided_slice %192 {offsets = [0, 56], sizes = [1, 8], strides = [1, 1]} : vector<1x128xf32> to vector<1x8xf32>
    %195 = tpu.reciprocal %194 {approx = true} : vector<1x8xf32> -> vector<1x8xf32>
    %196 = arith.mulf %194, %195 : vector<1x8xf32>
    %cst_27 = arith.constant 2.000000e+00 : f32
    %197 = vector.broadcast %cst_27 : f32 to vector<1x8xf32>
    %198 = arith.subf %197, %196 : vector<1x8xf32>
    %199 = arith.mulf %195, %198 : vector<1x8xf32>
    %c7_i32 = arith.constant 7 : i32
    %200 = vector.broadcast %c7_i32 : i32 to vector<16x8xi32>
    %201 = arith.cmpi eq, %30, %200 : vector<16x8xi32>
    %202 = arith.extui %201 : vector<16x8xi1> to vector<16x8xi32>
    %203 = arith.sitofp %202 : vector<16x8xi32> to vector<16x8xf32>
    %204 = vector.extract_strided_slice %188 {offsets = [0, 56], sizes = [16, 8], strides = [1, 1]} : vector<16x128xf32> to vector<16x8xf32>
    %205 = arith.subf %204, %203 : vector<16x8xf32>
    %206 = vector.broadcast %199 : vector<1x8xf32> to vector<16x8xf32>
    %207 = arith.mulf %205, %206 : vector<16x8xf32>
    %cst_28 = arith.constant dense<0.000000e+00> : vector<16x128xf32>
    %208 = tpu.matmul %207, %0, %cst_28 {dimension_numbers = #tpu.dot_dimension_numbers<[1], [0], [0], [1], [0, 0, 1, 1], [], []>} : vector<16x8xf32>, vector<8x128xf32>, vector<16x128xf32> -> vector<16x128xf32>
    %209 = vector.broadcast %192 : vector<1x128xf32> to vector<16x128xf32>
    %210 = arith.mulf %208, %209 : vector<16x128xf32>
    %211 = arith.subf %188, %210 : vector<16x128xf32>
    %212 = vector.broadcast %193 : vector<1x8xf32> to vector<16x8xf32>
    %213 = arith.mulf %207, %212 : vector<16x8xf32>
    %214 = arith.subf %191, %213 : vector<16x8xf32>
    %215 = vector.extract_strided_slice %211 {offsets = [8, 0], sizes = [1, 128], strides = [1, 1]} : vector<16x128xf32> to vector<1x128xf32>
    %216 = vector.extract_strided_slice %214 {offsets = [8, 0], sizes = [1, 8], strides = [1, 1]} : vector<16x8xf32> to vector<1x8xf32>
    %217 = vector.extract_strided_slice %215 {offsets = [0, 64], sizes = [1, 8], strides = [1, 1]} : vector<1x128xf32> to vector<1x8xf32>
    %218 = tpu.reciprocal %217 {approx = true} : vector<1x8xf32> -> vector<1x8xf32>
    %219 = arith.mulf %217, %218 : vector<1x8xf32>
    %cst_29 = arith.constant 2.000000e+00 : f32
    %220 = vector.broadcast %cst_29 : f32 to vector<1x8xf32>
    %221 = arith.subf %220, %219 : vector<1x8xf32>
    %222 = arith.mulf %218, %221 : vector<1x8xf32>
    %c8_i32_30 = arith.constant 8 : i32
    %223 = vector.broadcast %c8_i32_30 : i32 to vector<16x8xi32>
    %224 = arith.cmpi eq, %30, %223 : vector<16x8xi32>
    %225 = arith.extui %224 : vector<16x8xi1> to vector<16x8xi32>
    %226 = arith.sitofp %225 : vector<16x8xi32> to vector<16x8xf32>
    %227 = vector.extract_strided_slice %211 {offsets = [0, 64], sizes = [16, 8], strides = [1, 1]} : vector<16x128xf32> to vector<16x8xf32>
    %228 = arith.subf %227, %226 : vector<16x8xf32>
    %229 = vector.broadcast %222 : vector<1x8xf32> to vector<16x8xf32>
    %230 = arith.mulf %228, %229 : vector<16x8xf32>
    %cst_31 = arith.constant dense<0.000000e+00> : vector<16x128xf32>
    %231 = tpu.matmul %230, %0, %cst_31 {dimension_numbers = #tpu.dot_dimension_numbers<[1], [0], [0], [1], [0, 0, 1, 1], [], []>} : vector<16x8xf32>, vector<8x128xf32>, vector<16x128xf32> -> vector<16x128xf32>
    %232 = vector.broadcast %215 : vector<1x128xf32> to vector<16x128xf32>
    %233 = arith.mulf %231, %232 : vector<16x128xf32>
    %234 = arith.subf %211, %233 : vector<16x128xf32>
    %235 = vector.broadcast %216 : vector<1x8xf32> to vector<16x8xf32>
    %236 = arith.mulf %230, %235 : vector<16x8xf32>
    %237 = arith.subf %214, %236 : vector<16x8xf32>
    %238 = vector.extract_strided_slice %234 {offsets = [9, 0], sizes = [1, 128], strides = [1, 1]} : vector<16x128xf32> to vector<1x128xf32>
    %239 = vector.extract_strided_slice %237 {offsets = [9, 0], sizes = [1, 8], strides = [1, 1]} : vector<16x8xf32> to vector<1x8xf32>
    %240 = vector.extract_strided_slice %238 {offsets = [0, 72], sizes = [1, 8], strides = [1, 1]} : vector<1x128xf32> to vector<1x8xf32>
    %241 = tpu.reciprocal %240 {approx = true} : vector<1x8xf32> -> vector<1x8xf32>
    %242 = arith.mulf %240, %241 : vector<1x8xf32>
    %cst_32 = arith.constant 2.000000e+00 : f32
    %243 = vector.broadcast %cst_32 : f32 to vector<1x8xf32>
    %244 = arith.subf %243, %242 : vector<1x8xf32>
    %245 = arith.mulf %241, %244 : vector<1x8xf32>
    %c9_i32 = arith.constant 9 : i32
    %246 = vector.broadcast %c9_i32 : i32 to vector<16x8xi32>
    %247 = arith.cmpi eq, %30, %246 : vector<16x8xi32>
    %248 = arith.extui %247 : vector<16x8xi1> to vector<16x8xi32>
    %249 = arith.sitofp %248 : vector<16x8xi32> to vector<16x8xf32>
    %250 = vector.extract_strided_slice %234 {offsets = [0, 72], sizes = [16, 8], strides = [1, 1]} : vector<16x128xf32> to vector<16x8xf32>
    %251 = arith.subf %250, %249 : vector<16x8xf32>
    %252 = vector.broadcast %245 : vector<1x8xf32> to vector<16x8xf32>
    %253 = arith.mulf %251, %252 : vector<16x8xf32>
    %cst_33 = arith.constant dense<0.000000e+00> : vector<16x128xf32>
    %254 = tpu.matmul %253, %0, %cst_33 {dimension_numbers = #tpu.dot_dimension_numbers<[1], [0], [0], [1], [0, 0, 1, 1], [], []>} : vector<16x8xf32>, vector<8x128xf32>, vector<16x128xf32> -> vector<16x128xf32>
    %255 = vector.broadcast %238 : vector<1x128xf32> to vector<16x128xf32>
    %256 = arith.mulf %254, %255 : vector<16x128xf32>
    %257 = arith.subf %234, %256 : vector<16x128xf32>
    %258 = vector.broadcast %239 : vector<1x8xf32> to vector<16x8xf32>
    %259 = arith.mulf %253, %258 : vector<16x8xf32>
    %260 = arith.subf %237, %259 : vector<16x8xf32>
    %261 = vector.extract_strided_slice %257 {offsets = [10, 0], sizes = [1, 128], strides = [1, 1]} : vector<16x128xf32> to vector<1x128xf32>
    %262 = vector.extract_strided_slice %260 {offsets = [10, 0], sizes = [1, 8], strides = [1, 1]} : vector<16x8xf32> to vector<1x8xf32>
    %263 = vector.extract_strided_slice %261 {offsets = [0, 80], sizes = [1, 8], strides = [1, 1]} : vector<1x128xf32> to vector<1x8xf32>
    %264 = tpu.reciprocal %263 {approx = true} : vector<1x8xf32> -> vector<1x8xf32>
    %265 = arith.mulf %263, %264 : vector<1x8xf32>
    %cst_34 = arith.constant 2.000000e+00 : f32
    %266 = vector.broadcast %cst_34 : f32 to vector<1x8xf32>
    %267 = arith.subf %266, %265 : vector<1x8xf32>
    %268 = arith.mulf %264, %267 : vector<1x8xf32>
    %c10_i32 = arith.constant 10 : i32
    %269 = vector.broadcast %c10_i32 : i32 to vector<16x8xi32>
    %270 = arith.cmpi eq, %30, %269 : vector<16x8xi32>
    %271 = arith.extui %270 : vector<16x8xi1> to vector<16x8xi32>
    %272 = arith.sitofp %271 : vector<16x8xi32> to vector<16x8xf32>
    %273 = vector.extract_strided_slice %257 {offsets = [0, 80], sizes = [16, 8], strides = [1, 1]} : vector<16x128xf32> to vector<16x8xf32>
    %274 = arith.subf %273, %272 : vector<16x8xf32>
    %275 = vector.broadcast %268 : vector<1x8xf32> to vector<16x8xf32>
    %276 = arith.mulf %274, %275 : vector<16x8xf32>
    %cst_35 = arith.constant dense<0.000000e+00> : vector<16x128xf32>
    %277 = tpu.matmul %276, %0, %cst_35 {dimension_numbers = #tpu.dot_dimension_numbers<[1], [0], [0], [1], [0, 0, 1, 1], [], []>} : vector<16x8xf32>, vector<8x128xf32>, vector<16x128xf32> -> vector<16x128xf32>
    %278 = vector.broadcast %261 : vector<1x128xf32> to vector<16x128xf32>
    %279 = arith.mulf %277, %278 : vector<16x128xf32>
    %280 = arith.subf %257, %279 : vector<16x128xf32>
    %281 = vector.broadcast %262 : vector<1x8xf32> to vector<16x8xf32>
    %282 = arith.mulf %276, %281 : vector<16x8xf32>
    %283 = arith.subf %260, %282 : vector<16x8xf32>
    %284 = vector.extract_strided_slice %280 {offsets = [11, 0], sizes = [1, 128], strides = [1, 1]} : vector<16x128xf32> to vector<1x128xf32>
    %285 = vector.extract_strided_slice %283 {offsets = [11, 0], sizes = [1, 8], strides = [1, 1]} : vector<16x8xf32> to vector<1x8xf32>
    %286 = vector.extract_strided_slice %284 {offsets = [0, 88], sizes = [1, 8], strides = [1, 1]} : vector<1x128xf32> to vector<1x8xf32>
    %287 = tpu.reciprocal %286 {approx = true} : vector<1x8xf32> -> vector<1x8xf32>
    %288 = arith.mulf %286, %287 : vector<1x8xf32>
    %cst_36 = arith.constant 2.000000e+00 : f32
    %289 = vector.broadcast %cst_36 : f32 to vector<1x8xf32>
    %290 = arith.subf %289, %288 : vector<1x8xf32>
    %291 = arith.mulf %287, %290 : vector<1x8xf32>
    %c11_i32 = arith.constant 11 : i32
    %292 = vector.broadcast %c11_i32 : i32 to vector<16x8xi32>
    %293 = arith.cmpi eq, %30, %292 : vector<16x8xi32>
    %294 = arith.extui %293 : vector<16x8xi1> to vector<16x8xi32>
    %295 = arith.sitofp %294 : vector<16x8xi32> to vector<16x8xf32>
    %296 = vector.extract_strided_slice %280 {offsets = [0, 88], sizes = [16, 8], strides = [1, 1]} : vector<16x128xf32> to vector<16x8xf32>
    %297 = arith.subf %296, %295 : vector<16x8xf32>
    %298 = vector.broadcast %291 : vector<1x8xf32> to vector<16x8xf32>
    %299 = arith.mulf %297, %298 : vector<16x8xf32>
    %cst_37 = arith.constant dense<0.000000e+00> : vector<16x128xf32>
    %300 = tpu.matmul %299, %0, %cst_37 {dimension_numbers = #tpu.dot_dimension_numbers<[1], [0], [0], [1], [0, 0, 1, 1], [], []>} : vector<16x8xf32>, vector<8x128xf32>, vector<16x128xf32> -> vector<16x128xf32>
    %301 = vector.broadcast %284 : vector<1x128xf32> to vector<16x128xf32>
    %302 = arith.mulf %300, %301 : vector<16x128xf32>
    %303 = arith.subf %280, %302 : vector<16x128xf32>
    %304 = vector.broadcast %285 : vector<1x8xf32> to vector<16x8xf32>
    %305 = arith.mulf %299, %304 : vector<16x8xf32>
    %306 = arith.subf %283, %305 : vector<16x8xf32>
    %307 = vector.extract_strided_slice %303 {offsets = [12, 0], sizes = [1, 128], strides = [1, 1]} : vector<16x128xf32> to vector<1x128xf32>
    %308 = vector.extract_strided_slice %306 {offsets = [12, 0], sizes = [1, 8], strides = [1, 1]} : vector<16x8xf32> to vector<1x8xf32>
    %309 = vector.extract_strided_slice %307 {offsets = [0, 96], sizes = [1, 8], strides = [1, 1]} : vector<1x128xf32> to vector<1x8xf32>
    %310 = tpu.reciprocal %309 {approx = true} : vector<1x8xf32> -> vector<1x8xf32>
    %311 = arith.mulf %309, %310 : vector<1x8xf32>
    %cst_38 = arith.constant 2.000000e+00 : f32
    %312 = vector.broadcast %cst_38 : f32 to vector<1x8xf32>
    %313 = arith.subf %312, %311 : vector<1x8xf32>
    %314 = arith.mulf %310, %313 : vector<1x8xf32>
    %c12_i32 = arith.constant 12 : i32
    %315 = vector.broadcast %c12_i32 : i32 to vector<16x8xi32>
    %316 = arith.cmpi eq, %30, %315 : vector<16x8xi32>
    %317 = arith.extui %316 : vector<16x8xi1> to vector<16x8xi32>
    %318 = arith.sitofp %317 : vector<16x8xi32> to vector<16x8xf32>
    %319 = vector.extract_strided_slice %303 {offsets = [0, 96], sizes = [16, 8], strides = [1, 1]} : vector<16x128xf32> to vector<16x8xf32>
    %320 = arith.subf %319, %318 : vector<16x8xf32>
    %321 = vector.broadcast %314 : vector<1x8xf32> to vector<16x8xf32>
    %322 = arith.mulf %320, %321 : vector<16x8xf32>
    %cst_39 = arith.constant dense<0.000000e+00> : vector<16x128xf32>
    %323 = tpu.matmul %322, %0, %cst_39 {dimension_numbers = #tpu.dot_dimension_numbers<[1], [0], [0], [1], [0, 0, 1, 1], [], []>} : vector<16x8xf32>, vector<8x128xf32>, vector<16x128xf32> -> vector<16x128xf32>
    %324 = vector.broadcast %307 : vector<1x128xf32> to vector<16x128xf32>
    %325 = arith.mulf %323, %324 : vector<16x128xf32>
    %326 = arith.subf %303, %325 : vector<16x128xf32>
    %327 = vector.broadcast %308 : vector<1x8xf32> to vector<16x8xf32>
    %328 = arith.mulf %322, %327 : vector<16x8xf32>
    %329 = arith.subf %306, %328 : vector<16x8xf32>
    %330 = vector.extract_strided_slice %326 {offsets = [13, 0], sizes = [1, 128], strides = [1, 1]} : vector<16x128xf32> to vector<1x128xf32>
    %331 = vector.extract_strided_slice %329 {offsets = [13, 0], sizes = [1, 8], strides = [1, 1]} : vector<16x8xf32> to vector<1x8xf32>
    %332 = vector.extract_strided_slice %330 {offsets = [0, 104], sizes = [1, 8], strides = [1, 1]} : vector<1x128xf32> to vector<1x8xf32>
    %333 = tpu.reciprocal %332 {approx = true} : vector<1x8xf32> -> vector<1x8xf32>
    %334 = arith.mulf %332, %333 : vector<1x8xf32>
    %cst_40 = arith.constant 2.000000e+00 : f32
    %335 = vector.broadcast %cst_40 : f32 to vector<1x8xf32>
    %336 = arith.subf %335, %334 : vector<1x8xf32>
    %337 = arith.mulf %333, %336 : vector<1x8xf32>
    %c13_i32 = arith.constant 13 : i32
    %338 = vector.broadcast %c13_i32 : i32 to vector<16x8xi32>
    %339 = arith.cmpi eq, %30, %338 : vector<16x8xi32>
    %340 = arith.extui %339 : vector<16x8xi1> to vector<16x8xi32>
    %341 = arith.sitofp %340 : vector<16x8xi32> to vector<16x8xf32>
    %342 = vector.extract_strided_slice %326 {offsets = [0, 104], sizes = [16, 8], strides = [1, 1]} : vector<16x128xf32> to vector<16x8xf32>
    %343 = arith.subf %342, %341 : vector<16x8xf32>
    %344 = vector.broadcast %337 : vector<1x8xf32> to vector<16x8xf32>
    %345 = arith.mulf %343, %344 : vector<16x8xf32>
    %cst_41 = arith.constant dense<0.000000e+00> : vector<16x128xf32>
    %346 = tpu.matmul %345, %0, %cst_41 {dimension_numbers = #tpu.dot_dimension_numbers<[1], [0], [0], [1], [0, 0, 1, 1], [], []>} : vector<16x8xf32>, vector<8x128xf32>, vector<16x128xf32> -> vector<16x128xf32>
    %347 = vector.broadcast %330 : vector<1x128xf32> to vector<16x128xf32>
    %348 = arith.mulf %346, %347 : vector<16x128xf32>
    %349 = arith.subf %326, %348 : vector<16x128xf32>
    %350 = vector.broadcast %331 : vector<1x8xf32> to vector<16x8xf32>
    %351 = arith.mulf %345, %350 : vector<16x8xf32>
    %352 = arith.subf %329, %351 : vector<16x8xf32>
    %353 = vector.extract_strided_slice %349 {offsets = [14, 0], sizes = [1, 128], strides = [1, 1]} : vector<16x128xf32> to vector<1x128xf32>
    %354 = vector.extract_strided_slice %352 {offsets = [14, 0], sizes = [1, 8], strides = [1, 1]} : vector<16x8xf32> to vector<1x8xf32>
    %355 = vector.extract_strided_slice %353 {offsets = [0, 112], sizes = [1, 8], strides = [1, 1]} : vector<1x128xf32> to vector<1x8xf32>
    %356 = tpu.reciprocal %355 {approx = true} : vector<1x8xf32> -> vector<1x8xf32>
    %357 = arith.mulf %355, %356 : vector<1x8xf32>
    %cst_42 = arith.constant 2.000000e+00 : f32
    %358 = vector.broadcast %cst_42 : f32 to vector<1x8xf32>
    %359 = arith.subf %358, %357 : vector<1x8xf32>
    %360 = arith.mulf %356, %359 : vector<1x8xf32>
    %c14_i32 = arith.constant 14 : i32
    %361 = vector.broadcast %c14_i32 : i32 to vector<16x8xi32>
    %362 = arith.cmpi eq, %30, %361 : vector<16x8xi32>
    %363 = arith.extui %362 : vector<16x8xi1> to vector<16x8xi32>
    %364 = arith.sitofp %363 : vector<16x8xi32> to vector<16x8xf32>
    %365 = vector.extract_strided_slice %349 {offsets = [0, 112], sizes = [16, 8], strides = [1, 1]} : vector<16x128xf32> to vector<16x8xf32>
    %366 = arith.subf %365, %364 : vector<16x8xf32>
    %367 = vector.broadcast %360 : vector<1x8xf32> to vector<16x8xf32>
    %368 = arith.mulf %366, %367 : vector<16x8xf32>
    %cst_43 = arith.constant dense<0.000000e+00> : vector<16x128xf32>
    %369 = tpu.matmul %368, %0, %cst_43 {dimension_numbers = #tpu.dot_dimension_numbers<[1], [0], [0], [1], [0, 0, 1, 1], [], []>} : vector<16x8xf32>, vector<8x128xf32>, vector<16x128xf32> -> vector<16x128xf32>
    %370 = vector.broadcast %353 : vector<1x128xf32> to vector<16x128xf32>
    %371 = arith.mulf %369, %370 : vector<16x128xf32>
    %372 = arith.subf %349, %371 : vector<16x128xf32>
    %373 = vector.broadcast %354 : vector<1x8xf32> to vector<16x8xf32>
    %374 = arith.mulf %368, %373 : vector<16x8xf32>
    %375 = arith.subf %352, %374 : vector<16x8xf32>
    %376 = vector.extract_strided_slice %372 {offsets = [15, 0], sizes = [1, 128], strides = [1, 1]} : vector<16x128xf32> to vector<1x128xf32>
    %377 = vector.extract_strided_slice %375 {offsets = [15, 0], sizes = [1, 8], strides = [1, 1]} : vector<16x8xf32> to vector<1x8xf32>
    %378 = vector.extract_strided_slice %376 {offsets = [0, 120], sizes = [1, 8], strides = [1, 1]} : vector<1x128xf32> to vector<1x8xf32>
    %379 = tpu.reciprocal %378 {approx = true} : vector<1x8xf32> -> vector<1x8xf32>
    %380 = arith.mulf %378, %379 : vector<1x8xf32>
    %cst_44 = arith.constant 2.000000e+00 : f32
    %381 = vector.broadcast %cst_44 : f32 to vector<1x8xf32>
    %382 = arith.subf %381, %380 : vector<1x8xf32>
    %383 = arith.mulf %379, %382 : vector<1x8xf32>
    %c15_i32 = arith.constant 15 : i32
    %384 = vector.broadcast %c15_i32 : i32 to vector<16x8xi32>
    %385 = arith.cmpi eq, %30, %384 : vector<16x8xi32>
    %386 = arith.extui %385 : vector<16x8xi1> to vector<16x8xi32>
    %387 = arith.sitofp %386 : vector<16x8xi32> to vector<16x8xf32>
    %388 = vector.extract_strided_slice %372 {offsets = [0, 120], sizes = [16, 8], strides = [1, 1]} : vector<16x128xf32> to vector<16x8xf32>
    %389 = arith.subf %388, %387 : vector<16x8xf32>
    %390 = vector.broadcast %383 : vector<1x8xf32> to vector<16x8xf32>
    %391 = arith.mulf %389, %390 : vector<16x8xf32>
    %392 = vector.broadcast %377 : vector<1x8xf32> to vector<16x8xf32>
    %393 = arith.mulf %391, %392 : vector<16x8xf32>
    %394 = arith.subf %375, %393 : vector<16x8xf32>
    %cst_45 = arith.constant 0.000000e+00 : f32
    %395 = vector.broadcast %cst_45 : f32 to vector<16x8xf32>
    %396 = arith.cmpf oge, %394, %395 : vector<16x8xf32>
    %cst_46 = arith.constant 0.00999999977 : f32
    %397 = vector.broadcast %cst_46 : f32 to vector<16x8xf32>
    %398 = arith.mulf %397, %394 : vector<16x8xf32>
    %399 = arith.select %396, %394, %398 : vector<16x8xi1>, vector<16x8xf32>
    %cst_47 = arith.constant dense<0.000000e+00> : vector<16x128xf32>
    %400 = tpu.matmul %399, %0, %cst_47 {dimension_numbers = #tpu.dot_dimension_numbers<[1], [0], [0], [1], [0, 0, 1, 1], [], []>} : vector<16x8xf32>, vector<8x128xf32>, vector<16x128xf32> -> vector<16x128xf32>
    %cst_48 = arith.constant 1.000000e+00 : f32
    %401 = vector.broadcast %cst_48 : f32 to vector<1x16xf32>
    %402 = arith.mulf %22, %400 : vector<16x128xf32>
    %cst_49 = arith.constant dense<0.000000e+00> : vector<1x128xf32>
    %403 = tpu.matmul %401, %402, %cst_49 {dimension_numbers = #tpu.dot_dimension_numbers<[1], [0], [0], [1], [0, 0, 1, 1], [], []>} : vector<1x16xf32>, vector<16x128xf32>, vector<1x128xf32> -> vector<1x128xf32>
    %c0_50 = arith.constant 0 : index
    %c0_51 = arith.constant 0 : index
    %404 = vector.load %arg5[%c0_50, %c0_51] : memref<1x128xf32, #tpu.memory_space<vmem>>, vector<1x128xf32>
    tpu.vector_store %arg5[%c0_50, %c0_51], %403 {strides = array<i32>} : memref<1x128xf32, #tpu.memory_space<vmem>>, vector<1x128xf32>,
    return
  }
}

</mosaic_0001>

<llo_original>
// kernel: tpu_custom_call.1
$region0: #{tpu_custom_call.1}
  #allocation0 [shape = 'u32[]', space=smem, size = 0x4, offset = 0x4, fixed_abs, tag = 'smem constant byte address 0x4 - core index']
  #allocation1 [shape = 'u32[144,128]{1,0:T(1,128)}', space=vmem, size = 0x12000, scoped, tag = 'internal scratch']
  %s0 = inlined_call_operand.vmem [shape: f32[16,16], index: 0, kind: input, shape index: {}]
  %s1 = inlined_call_operand.vmem [shape: f32[16,1], index: 1, kind: input, shape index: {}]
  %s2 = inlined_call_operand.vmem [shape: f32[1,8], index: 2, kind: input, shape index: {}]
  %s3 = inlined_call_operand.vmem [shape: f32[16,8], index: 3, kind: input, shape index: {}]
  %s4 = inlined_call_operand.vmem [shape: f32[8,128], index: 4, kind: input, shape index: {}]
  %s5 = inlined_call_operand.hbm [shape: f32[1,128], index: 5, kind: output, shape index: {}]
  %s6 = sld [smem:[#allocation0]]
  $region30: #{tpu_custom_call.1} parent=0
    _
  %s8 = ssub.s32 1, %s6
  %s9 = scalar_select 0, %s8, %s6
  $region1: #{tpu_custom_call.1} parent=0
    #allocation2 [shape = 'u8[512]{0}', space=vmem, size = 0x400, scoped, tag = 'output window, operand 0, single buffered']
    #allocation3 [shape = 's32[1]{0}', space=sflag, size = 0x4, scoped, tag = 'scoped memory for tpu_custom_call.1']
    %10 = vsyncpa [#allocation3], 0
    // Predicated region
    $region2: #{tpu_custom_call.1} parent=1 // pred_check
      _
    $region3: #{tpu_custom_call.1} parent=1 // pred_check_branch
      %12 = sbr.rel (0) target = $region5
    $region4: #{tpu_custom_call.1} parent=1 // pred_region
      _
    $region5: #{tpu_custom_call.1} parent=1 // pred_fallthru
      _
    // Predicated region
    $region6: #{tpu_custom_call.1} parent=1 // pred_check
      _
    $region7: #{tpu_custom_call.1} parent=1 // pred_check_branch
      %14 = sbr.rel (0) target = $region9
    $region8: #{tpu_custom_call.1} parent=1 // pred_region
      _
    $region9: #{tpu_custom_call.1} parent=1 // pred_fallthru
      _
    // Predicated region
    $region10: #{tpu_custom_call.1} parent=1 // pred_check
      _
    $region11: #{tpu_custom_call.1} parent=1 // pred_check_branch
      %16 = sbr.rel (0) target = $region13
    $region12: #{tpu_custom_call.1} parent=1 // pred_region
      _
    $region13: #{tpu_custom_call.1} parent=1 // pred_fallthru
      _
    // Predicated region
    $region14: #{tpu_custom_call.1} parent=1 // pred_check
      _
    $region15: #{tpu_custom_call.1} parent=1 // pred_check_branch
      %18 = sbr.rel (0) target = $region17
    $region16: #{tpu_custom_call.1} parent=1 // pred_region
      _
    $region17: #{tpu_custom_call.1} parent=1 // pred_fallthru
      _
    // Predicated region
    $region18: #{tpu_custom_call.1} parent=1 // pred_check
      _
    $region19: #{tpu_custom_call.1} parent=1 // pred_check_branch
      %20 = sbr.rel (0) target = $region21
    $region20: #{tpu_custom_call.1} parent=1 // pred_region
      _
    $region21: #{tpu_custom_call.1} parent=1 // pred_fallthru
      _
    %v21 = vld [vmem:[%s4] sm:$0xff]
    %v22 = vld [vmem:[%s0] sm:$0xff]
    %v23 = vld [vmem:[%s0 + $0x8] sm:$0xff]
    %v24 = vld [vmem:[%s1] sm:$0xff]
    %v25 = vld [vmem:[%s1 + $0x8] sm:$0xff]
    %v26 = vrcp.pop %v24
    %v27 = vrcp.pop %v25
    %v28 = vmul.f32 %v24, %v26
    %v29 = vmul.f32 %v25, %v27
    %v30 = vsub.f32 2.0, %v28
    %v31 = vsub.f32 2.0, %v29
    %v32 = vmul.f32 %v26, %v30
    %v33 = vmul.f32 %v27, %v31
    %v34 = vld [vmem:[%s2] sm:$0x1]
    %v35 = vmax.f32 %v34, 1e-08
    %v36 = vld [vmem:[%s3] sm:$0xff]
    %v37 = vld [vmem:[%s3 + $0x8] sm:$0xff]
    %v38 = vlaneseq
    %v39 = vand.u32 %v38, 127
    %v40 = vlaneseq
    %v41 = vshrl.u32 %v40, 7
    %v42 = vadd.s32 %v41, 8
    %v43 = vmul.u32 %v41, 8
    %v44 = vmul.u32 %v42, 8
    %vm45 = vcmp.ge.s32.totalorder %v39, %v43
    %vm46 = vcmp.ge.s32.totalorder %v39, %v44
    %v47 = vadd.s32 %v43, 8
    %v48 = vadd.s32 %v44, 8
    %vm49 = vcmp.lt.s32.totalorder %v39, %v47
    %vm50 = vcmp.lt.s32.totalorder %v39, %v48
    %vm51 = vmand %vm45, %vm49
    %vm52 = vmand %vm46, %vm50
    %v53 = vsel %vm51, 1, 0
    %v54 = vsel %vm52, 1, 0
    %v55 = vcvt.s32.f32 %v53
    %v56 = vcvt.s32.f32 %v54
    %58 = vset.pattern.permute.xlu0 0
    %59 = vperm.xlu0 %58, %v32
    %v60 = vpop.permute.xlu0 %59
    %63 = vset.pattern.permute.xlu0 0
    %64 = vperm.xlu0 %63, %v33
    %v65 = vpop.permute.xlu0 %64
    %v68 = vlaneseq
    %v69 = vshrl.u32 %v68, 7
    %v70 = vsub.s32 0, %v69
    %v71 = vrot.slane %v35, %v70
    %v73 = vmul.f32 %v60, %v71
    %v74 = vmul.f32 %v65, %v71
    %vm75 = vcmask 64512
    %v77 = vsel %vm75, %v73, 0
    %v80 = vsel %vm75, %v74, 0
    %82 = vmatprep.subr.mxu0 0.0
    %83 = vmatpush1.msra.mxu0 %v21
    %84 = vmatprep.subr.mxu0 0.0
    %85 = vmatpush1.msra.mxu0 0.0
    %86 = vmatprep.subr.mxu0 0.0
    %87 = vmatpush1.msra.mxu0 0.0
    %88 = vmatprep.subr.mxu0 0.0
    %89 = vmatpush1.msra.mxu0 0.0
    %90 = vmatprep.subr.mxu0 0.0
    %91 = vmatpush1.msra.mxu0 0.0
    %92 = vmatprep.subr.mxu0 0.0
    %93 = vmatpush1.msra.mxu0 0.0
    %94 = vmatprep.subr.mxu0 0.0
    %95 = vmatpush1.msra.mxu0 0.0
    %96 = vmatprep.subr.mxu0 0.0
    %97 = vmatpush1.msra.mxu0 0.0
    %98 = vmatprep.subr.mxu0 0.0
    %99 = vmatpush1.msra.mxu0 0.0
    %100 = vmatprep.subr.mxu0 0.0
    %101 = vmatpush1.msra.mxu0 0.0
    %102 = vmatprep.subr.mxu0 0.0
    %103 = vmatpush1.msra.mxu0 0.0
    %104 = vmatprep.subr.mxu0 0.0
    %105 = vmatpush1.msra.mxu0 0.0
    %106 = vmatprep.subr.mxu0 0.0
    %107 = vmatpush1.msra.mxu0 0.0
    %108 = vmatprep.subr.mxu0 0.0
    %109 = vmatpush1.msra.mxu0 0.0
    %110 = vmatprep.subr.mxu0 0.0
    %111 = vmatpush1.msra.mxu0 0.0
    %112 = vmatprep.subr.mxu0 0.0
    %113 = vmatpush1.msra.mxu0 0.0
    %114 = vmatprep.subr.mxu0 0.0
    %115 = vmatpush1.msra.mxu0 0.0
    %116 = vmatprep.subr.mxu0 0.0
    %117 = vmatpush1.msra.mxu0 0.0
    %118 = vmatprep.subr.mxu0 0.0
    %119 = vmatpush1.msra.mxu0 0.0
    %120 = vmatprep.subr.mxu0 0.0
    %121 = vmatpush1.msra.mxu0 0.0
    %122 = vmatprep.subr.mxu0 0.0
    %123 = vmatpush1.msra.mxu0 0.0
    %124 = vmatprep.subr.mxu0 0.0
    %125 = vmatpush1.msra.mxu0 0.0
    %126 = vmatprep.subr.mxu0 0.0
    %127 = vmatpush1.msra.mxu0 0.0
    %128 = vmatprep.subr.mxu0 0.0
    %129 = vmatpush1.msra.mxu0 0.0
    %130 = vmatprep.subr.mxu0 0.0
    %131 = vmatpush1.msra.mxu0 0.0
    %132 = vmatprep.subr.mxu0 0.0
    %133 = vmatpush1.msra.mxu0 0.0
    %134 = vmatprep.subr.mxu0 0.0
    %135 = vmatpush1.msra.mxu0 0.0
    %136 = vmatprep.subr.mxu0 0.0
    %137 = vmatpush1.msra.mxu0 0.0
    %138 = vmatprep.subr.mxu0 0.0
    %139 = vmatpush1.msra.mxu0 0.0
    %140 = vmatprep.subr.mxu0 0.0
    %141 = vmatpush1.msra.mxu0 0.0
    %142 = vmatprep.subr.mxu0 0.0
    %143 = vmatpush1.msra.mxu0 0.0
    %144 = vmatprep.subr.mxu0 0.0
    %145 = vmatpush1.msra.mxu0 0.0
    %146 = vmatprep.mubr.f32.mxu0 0.0
    %147 = vmatmul.mubr.f32.gmra.mrb[0].mxu0 %v77
    %v148 = vpop.f32.mrb[0].mxu0
    %v149 = vadd.f32 0.0, %v148
    %v150 = vpop.f32.mrb[0].mxu0
    %151 = vmatprep.mubr.f32.mxu0 0.0
    %152 = vmatmul.mubr.f32.gmra.mrb[0].mxu0 %v80
    %v153 = vpop.f32.mrb[0].mxu0
    %v154 = vadd.f32 0.0, %v153
    %v155 = vpop.f32.mrb[0].mxu0
    %156 = vdwg.mxu0
    %vm157 = vcmask 130048
    %v159 = vsel %vm157, %v22, 0
    %v162 = vsel %vm157, %v23, 0
    %164 = vmatprep.subr.mxu0 0.0
    %165 = vmatpush1.msra.mxu0 %v55
    %166 = vmatprep.subr.mxu0 0.0
    %167 = vmatpush1.msra.mxu0 %v56
    %168 = vmatprep.subr.mxu0 0.0
    %169 = vmatpush1.msra.mxu0 0.0
    %170 = vmatprep.subr.mxu0 0.0
    %171 = vmatpush1.msra.mxu0 0.0
    %172 = vmatprep.subr.mxu0 0.0
    %173 = vmatpush1.msra.mxu0 0.0
    %174 = vmatprep.subr.mxu0 0.0
    %175 = vmatpush1.msra.mxu0 0.0
    %176 = vmatprep.subr.mxu0 0.0
    %177 = vmatpush1.msra.mxu0 0.0
    %178 = vmatprep.subr.mxu0 0.0
    %179 = vmatpush1.msra.mxu0 0.0
    %180 = vmatprep.subr.mxu0 0.0
    %181 = vmatpush1.msra.mxu0 0.0
    %182 = vmatprep.subr.mxu0 0.0
    %183 = vmatpush1.msra.mxu0 0.0
    %184 = vmatprep.subr.mxu0 0.0
    %185 = vmatpush1.msra.mxu0 0.0
    %186 = vmatprep.subr.mxu0 0.0
    %187 = vmatpush1.msra.mxu0 0.0
    %188 = vmatprep.subr.mxu0 0.0
    %189 = vmatpush1.msra.mxu0 0.0
    %190 = vmatprep.subr.mxu0 0.0
    %191 = vmatpush1.msra.mxu0 0.0
    %192 = vmatprep.subr.mxu0 0.0
    %193 = vmatpush1.msra.mxu0 0.0
    %194 = vmatprep.subr.mxu0 0.0
    %195 = vmatpush1.msra.mxu0 0.0
    %196 = vmatprep.subr.mxu0 0.0
    %197 = vmatpush1.msra.mxu0 0.0
    %198 = vmatprep.subr.mxu0 0.0
    %199 = vmatpush1.msra.mxu0 0.0
    %200 = vmatprep.subr.mxu0 0.0
    %201 = vmatpush1.msra.mxu0 0.0
    %202 = vmatprep.subr.mxu0 0.0
    %203 = vmatpush1.msra.mxu0 0.0
    %204 = vmatprep.subr.mxu0 0.0
    %205 = vmatpush1.msra.mxu0 0.0
    %206 = vmatprep.subr.mxu0 0.0
    %207 = vmatpush1.msra.mxu0 0.0
    %208 = vmatprep.subr.mxu0 0.0
    %209 = vmatpush1.msra.mxu0 0.0
    %210 = vmatprep.subr.mxu0 0.0
    %211 = vmatpush1.msra.mxu0 0.0
    %212 = vmatprep.subr.mxu0 0.0
    %213 = vmatpush1.msra.mxu0 0.0
    %214 = vmatprep.subr.mxu0 0.0
    %215 = vmatpush1.msra.mxu0 0.0
    %216 = vmatprep.subr.mxu0 0.0
    %217 = vmatpush1.msra.mxu0 0.0
    %218 = vmatprep.subr.mxu0 0.0
    %219 = vmatpush1.msra.mxu0 0.0
    %220 = vmatprep.subr.mxu0 0.0
    %221 = vmatpush1.msra.mxu0 0.0
    %222 = vmatprep.subr.mxu0 0.0
    %223 = vmatpush1.msra.mxu0 0.0
    %224 = vmatprep.subr.mxu0 0.0
    %225 = vmatpush1.msra.mxu0 0.0
    %226 = vmatprep.subr.mxu0 0.0
    %227 = vmatpush1.msra.mxu0 0.0
    %228 = vmatprep.mubr.f32.mxu0 0.0
    %229 = vmatmul.mubr.f32.gmra.mrb[0].mxu0 %v159
    %v230 = vpop.f32.mrb[0].mxu0
    %v231 = vadd.f32 0.0, %v230
    %v232 = vpop.f32.mrb[0].mxu0
    %233 = vmatprep.mubr.f32.mxu0 0.0
    %234 = vmatmul.mubr.f32.gmra.mrb[0].mxu0 %v162
    %v235 = vpop.f32.mrb[0].mxu0
    %v236 = vadd.f32 0.0, %v235
    %v237 = vpop.f32.mrb[0].mxu0
    %238 = vdwg.mxu0
    %v239 = vmul.f32 %v149, %v231
    %v240 = vmul.f32 %v154, %v236
    %v241 = vsub.f32 %v55, %v239
    %v242 = vsub.f32 %v56, %v240
    %v243 = vrcp.pop %v241
    %v244 = vmul.f32 %v241, %v243
    %v245 = vsub.f32 2.0, %v244
    %v246 = vmul.f32 %v243, %v245
    %vm247 = vcmp.eq.s32.totalorder %v41, 0
    %vm248 = vcmp.eq.s32.totalorder %v42, 0
    %v249 = vsel %vm247, 1, 0
    %v250 = vsel %vm248, 1, 0
    %v251 = vcvt.s32.f32 %v249
    %v252 = vcvt.s32.f32 %v250
    %v253 = vsub.f32 %v241, %v251
    %v254 = vsub.f32 %v242, %v252
    %v255 = vlaneseq
    %v256 = vshrl.u32 %v255, 7
    %v257 = vsub.s32 0, %v256
    %v258 = vrot.slane %v246, %v257
    %v259 = vmul.f32 %v253, %v258
    %v260 = vmul.f32 %v254, %v258
    %v262 = vsel %vm75, %v259, 0
    %v265 = vsel %vm75, %v260, 0
    %267 = vmatprep.subr.mxu0 0.0
    %268 = vmatpush1.msra.mxu0 %v21
    %269 = vmatprep.subr.mxu0 0.0
    %270 = vmatpush1.msra.mxu0 0.0
    %271 = vmatprep.subr.mxu0 0.0
    %272 = vmatpush1.msra.mxu0 0.0
    %273 = vmatprep.subr.mxu0 0.0
    %274 = vmatpush1.msra.mxu0 0.0
    %275 = vmatprep.subr.mxu0 0.0
    %276 = vmatpush1.msra.mxu0 0.0
    %277 = vmatprep.subr.mxu0 0.0
    %278 = vmatpush1.msra.mxu0 0.0
    %279 = vmatprep.subr.mxu0 0.0
    %280 = vmatpush1.msra.mxu0 0.0
    %281 = vmatprep.subr.mxu0 0.0
    %282 = vmatpush1.msra.mxu0 0.0
    %283 = vmatprep.subr.mxu0 0.0
    %284 = vmatpush1.msra.mxu0 0.0
    %285 = vmatprep.subr.mxu0 0.0
    %286 = vmatpush1.msra.mxu0 0.0
    %287 = vmatprep.subr.mxu0 0.0
    %288 = vmatpush1.msra.mxu0 0.0
    %289 = vmatprep.subr.mxu0 0.0
    %290 = vmatpush1.msra.mxu0 0.0
    %291 = vmatprep.subr.mxu0 0.0
    %292 = vmatpush1.msra.mxu0 0.0
    %293 = vmatprep.subr.mxu0 0.0
    %294 = vmatpush1.msra.mxu0 0.0
    %295 = vmatprep.subr.mxu0 0.0
    %296 = vmatpush1.msra.mxu0 0.0
    %297 = vmatprep.subr.mxu0 0.0
    %298 = vmatpush1.msra.mxu0 0.0
    %299 = vmatprep.subr.mxu0 0.0
    %300 = vmatpush1.msra.mxu0 0.0
    %301 = vmatprep.subr.mxu0 0.0
    %302 = vmatpush1.msra.mxu0 0.0
    %303 = vmatprep.subr.mxu0 0.0
    %304 = vmatpush1.msra.mxu0 0.0
    %305 = vmatprep.subr.mxu0 0.0
    %306 = vmatpush1.msra.mxu0 0.0
    %307 = vmatprep.subr.mxu0 0.0
    %308 = vmatpush1.msra.mxu0 0.0
    %309 = vmatprep.subr.mxu0 0.0
    %310 = vmatpush1.msra.mxu0 0.0
    %311 = vmatprep.subr.mxu0 0.0
    %312 = vmatpush1.msra.mxu0 0.0
    %313 = vmatprep.subr.mxu0 0.0
    %314 = vmatpush1.msra.mxu0 0.0
    %315 = vmatprep.subr.mxu0 0.0
    %316 = vmatpush1.msra.mxu0 0.0
    %317 = vmatprep.subr.mxu0 0.0
    %318 = vmatpush1.msra.mxu0 0.0
    %319 = vmatprep.subr.mxu0 0.0
    %320 = vmatpush1.msra.mxu0 0.0
    %321 = vmatprep.subr.mxu0 0.0
    %322 = vmatpush1.msra.mxu0 0.0
    %323 = vmatprep.subr.mxu0 0.0
    %324 = vmatpush1.msra.mxu0 0.0
    %325 = vmatprep.subr.mxu0 0.0
    %326 = vmatpush1.msra.mxu0 0.0
    %327 = vmatprep.subr.mxu0 0.0
    %328 = vmatpush1.msra.mxu0 0.0
    %329 = vmatprep.subr.mxu0 0.0
    %330 = vmatpush1.msra.mxu0 0.0
    %331 = vmatprep.mubr.f32.mxu0 0.0
    %332 = vmatmul.mubr.f32.gmra.mrb[0].mxu0 %v262
    %v333 = vpop.f32.mrb[0].mxu0
    %v334 = vadd.f32 0.0, %v333
    %v335 = vpop.f32.mrb[0].mxu0
    %336 = vmatprep.mubr.f32.mxu0 0.0
    %337 = vmatmul.mubr.f32.gmra.mrb[0].mxu0 %v265
    %v338 = vpop.f32.mrb[0].mxu0
    %v339 = vadd.f32 0.0, %v338
    %v340 = vpop.f32.mrb[0].mxu0
    %341 = vdwg.mxu0
    %v342 = vlaneseq
    %v343 = vshrl.u32 %v342, 7
    %v344 = vsub.s32 0, %v343
    %v345 = vrot.slane %v241, %v344
    %v346 = vmul.f32 %v334, %v345
    %v347 = vmul.f32 %v339, %v345
    %v348 = vsub.f32 %v241, %v346
    %v349 = vsub.f32 %v242, %v347
    %v350 = vlaneseq
    %v351 = vshrl.u32 %v350, 7
    %v352 = vsub.s32 0, %v351
    %v353 = vrot.slane %v36, %v352
    %v354 = vmul.f32 %v259, %v353
    %v355 = vmul.f32 %v260, %v353
    %v356 = vsub.f32 %v36, %v354
    %v357 = vsub.f32 %v37, %v355
    %v358 = vrcp.pop %v348
    %v359 = vmul.f32 %v348, %v358
    %v360 = vsub.f32 2.0, %v359
    %v361 = vmul.f32 %v358, %v360
    %vm362 = vcmp.eq.s32.totalorder %v41, 1
    %vm363 = vcmp.eq.s32.totalorder %v42, 1
    %v364 = vsel %vm362, 1, 0
    %v365 = vsel %vm363, 1, 0
    %v366 = vcvt.s32.f32 %v364
    %v367 = vcvt.s32.f32 %v365
    %v368 = vsub.f32 %v348, %v366
    %v369 = vsub.f32 %v349, %v367
    %v370 = vlaneseq
    %v371 = vshrl.u32 %v370, 7
    %v372 = vsub.s32 1, %v371
    %v373 = vrot.slane %v361, %v372
    %v374 = vmul.f32 %v368, %v373
    %v375 = vmul.f32 %v369, %v373
    %378 = vrot.lane.b32.xlu0 %v374, 120
    %v379 = vpop.permute.xlu0 %378
    %380 = vrot.lane.b32.xlu0 %v375, 120
    %v381 = vpop.permute.xlu0 %380
    %v382 = vsel %vm75, %v379, 0
    %v384 = vsel %vm75, %v381, 0
    %386 = vmatprep.subr.mxu0 0.0
    %387 = vmatpush1.msra.mxu0 %v21
    %388 = vmatprep.subr.mxu0 0.0
    %389 = vmatpush1.msra.mxu0 0.0
    %390 = vmatprep.subr.mxu0 0.0
    %391 = vmatpush1.msra.mxu0 0.0
    %392 = vmatprep.subr.mxu0 0.0
    %393 = vmatpush1.msra.mxu0 0.0
    %394 = vmatprep.subr.mxu0 0.0
    %395 = vmatpush1.msra.mxu0 0.0
    %396 = vmatprep.subr.mxu0 0.0
    %397 = vmatpush1.msra.mxu0 0.0
    %398 = vmatprep.subr.mxu0 0.0
    %399 = vmatpush1.msra.mxu0 0.0
    %400 = vmatprep.subr.mxu0 0.0
    %401 = vmatpush1.msra.mxu0 0.0
    %402 = vmatprep.subr.mxu0 0.0
    %403 = vmatpush1.msra.mxu0 0.0
    %404 = vmatprep.subr.mxu0 0.0
    %405 = vmatpush1.msra.mxu0 0.0
    %406 = vmatprep.subr.mxu0 0.0
    %407 = vmatpush1.msra.mxu0 0.0
    %408 = vmatprep.subr.mxu0 0.0
    %409 = vmatpush1.msra.mxu0 0.0
    %410 = vmatprep.subr.mxu0 0.0
    %411 = vmatpush1.msra.mxu0 0.0
    %412 = vmatprep.subr.mxu0 0.0
    %413 = vmatpush1.msra.mxu0 0.0
    %414 = vmatprep.subr.mxu0 0.0
    %415 = vmatpush1.msra.mxu0 0.0
    %416 = vmatprep.subr.mxu0 0.0
    %417 = vmatpush1.msra.mxu0 0.0
    %418 = vmatprep.subr.mxu0 0.0
    %419 = vmatpush1.msra.mxu0 0.0
    %420 = vmatprep.subr.mxu0 0.0
    %421 = vmatpush1.msra.mxu0 0.0
    %422 = vmatprep.subr.mxu0 0.0
    %423 = vmatpush1.msra.mxu0 0.0
    %424 = vmatprep.subr.mxu0 0.0
    %425 = vmatpush1.msra.mxu0 0.0
    %426 = vmatprep.subr.mxu0 0.0
    %427 = vmatpush1.msra.mxu0 0.0
    %428 = vmatprep.subr.mxu0 0.0
    %429 = vmatpush1.msra.mxu0 0.0
    %430 = vmatprep.subr.mxu0 0.0
    %431 = vmatpush1.msra.mxu0 0.0
    %432 = vmatprep.subr.mxu0 0.0
    %433 = vmatpush1.msra.mxu0 0.0
    %434 = vmatprep.subr.mxu0 0.0
    %435 = vmatpush1.msra.mxu0 0.0
    %436 = vmatprep.subr.mxu0 0.0
    %437 = vmatpush1.msra.mxu0 0.0
    %438 = vmatprep.subr.mxu0 0.0
    %439 = vmatpush1.msra.mxu0 0.0
    %440 = vmatprep.subr.mxu0 0.0
    %441 = vmatpush1.msra.mxu0 0.0
    %442 = vmatprep.subr.mxu0 0.0
    %443 = vmatpush1.msra.mxu0 0.0
    %444 = vmatprep.subr.mxu0 0.0
    %445 = vmatpush1.msra.mxu0 0.0
    %446 = vmatprep.subr.mxu0 0.0
    %447 = vmatpush1.msra.mxu0 0.0
    %448 = vmatprep.subr.mxu0 0.0
    %449 = vmatpush1.msra.mxu0 0.0
    %450 = vmatprep.mubr.f32.mxu0 0.0
    %451 = vmatmul.mubr.f32.gmra.mrb[0].mxu0 %v382
    %v452 = vpop.f32.mrb[0].mxu0
    %v453 = vadd.f32 0.0, %v452
    %v454 = vpop.f32.mrb[0].mxu0
    %455 = vmatprep.mubr.f32.mxu0 0.0
    %456 = vmatmul.mubr.f32.gmra.mrb[0].mxu0 %v384
    %v457 = vpop.f32.mrb[0].mxu0
    %v458 = vadd.f32 0.0, %v457
    %v459 = vpop.f32.mrb[0].mxu0
    %460 = vdwg.mxu0
    %v461 = vlaneseq
    %v462 = vshrl.u32 %v461, 7
    %v463 = vsub.s32 1, %v462
    %v464 = vrot.slane %v348, %v463
    %v465 = vmul.f32 %v453, %v464
    %v466 = vmul.f32 %v458, %v464
    %v467 = vsub.f32 %v348, %v465
    %v468 = vsub.f32 %v349, %v466
    %v469 = vlaneseq
    %v470 = vshrl.u32 %v469, 7
    %v471 = vsub.s32 1, %v470
    %v472 = vrot.slane %v356, %v471
    %474 = vrot.lane.b32.xlu0 %v472, 8
    %v475 = vpop.permute.xlu0 %474
    %v477 = vmul.f32 %v374, %v475
    %v478 = vmul.f32 %v375, %v475
    %481 = vrot.lane.b32.xlu0 %v477, 120
    %v482 = vpop.permute.xlu0 %481
    %483 = vrot.lane.b32.xlu0 %v478, 120
    %v484 = vpop.permute.xlu0 %483
    %v487 = vsub.f32 %v356, %v482
    %v488 = vsub.f32 %v357, %v484
    %v489 = vrcp.pop %v467
    %v490 = vmul.f32 %v467, %v489
    %v491 = vsub.f32 2.0, %v490
    %v492 = vmul.f32 %v489, %v491
    %vm493 = vcmp.eq.s32.totalorder %v41, 2
    %vm494 = vcmp.eq.s32.totalorder %v42, 2
    %v495 = vsel %vm493, 1, 0
    %v496 = vsel %vm494, 1, 0
    %v497 = vcvt.s32.f32 %v495
    %v498 = vcvt.s32.f32 %v496
    %v499 = vsub.f32 %v467, %v497
    %v500 = vsub.f32 %v468, %v498
    %v501 = vlaneseq
    %v502 = vshrl.u32 %v501, 7
    %v503 = vsub.s32 2, %v502
    %v504 = vrot.slane %v492, %v503
    %v505 = vmul.f32 %v499, %v504
    %v506 = vmul.f32 %v500, %v504
    %509 = vrot.lane.b32.xlu0 %v505, 112
    %v510 = vpop.permute.xlu0 %509
    %511 = vrot.lane.b32.xlu0 %v506, 112
    %v512 = vpop.permute.xlu0 %511
    %v513 = vsel %vm75, %v510, 0
    %v515 = vsel %vm75, %v512, 0
    %517 = vmatprep.subr.mxu0 0.0
    %518 = vmatpush1.msra.mxu0 %v21
    %519 = vmatprep.subr.mxu0 0.0
    %520 = vmatpush1.msra.mxu0 0.0
    %521 = vmatprep.subr.mxu0 0.0
    %522 = vmatpush1.msra.mxu0 0.0
    %523 = vmatprep.subr.mxu0 0.0
    %524 = vmatpush1.msra.mxu0 0.0
    %525 = vmatprep.subr.mxu0 0.0
    %526 = vmatpush1.msra.mxu0 0.0
    %527 = vmatprep.subr.mxu0 0.0
    %528 = vmatpush1.msra.mxu0 0.0
    %529 = vmatprep.subr.mxu0 0.0
    %530 = vmatpush1.msra.mxu0 0.0
    %531 = vmatprep.subr.mxu0 0.0
    %532 = vmatpush1.msra.mxu0 0.0
    %533 = vmatprep.subr.mxu0 0.0
    %534 = vmatpush1.msra.mxu0 0.0
    %535 = vmatprep.subr.mxu0 0.0
    %536 = vmatpush1.msra.mxu0 0.0
    %537 = vmatprep.subr.mxu0 0.0
    %538 = vmatpush1.msra.mxu0 0.0
    %539 = vmatprep.subr.mxu0 0.0
    %540 = vmatpush1.msra.mxu0 0.0
    %541 = vmatprep.subr.mxu0 0.0
    %542 = vmatpush1.msra.mxu0 0.0
    %543 = vmatprep.subr.mxu0 0.0
    %544 = vmatpush1.msra.mxu0 0.0
    %545 = vmatprep.subr.mxu0 0.0
    %546 = vmatpush1.msra.mxu0 0.0
    %547 = vmatprep.subr.mxu0 0.0
    %548 = vmatpush1.msra.mxu0 0.0
    %549 = vmatprep.subr.mxu0 0.0
    %550 = vmatpush1.msra.mxu0 0.0
    %551 = vmatprep.subr.mxu0 0.0
    %552 = vmatpush1.msra.mxu0 0.0
    %553 = vmatprep.subr.mxu0 0.0
    %554 = vmatpush1.msra.mxu0 0.0
    %555 = vmatprep.subr.mxu0 0.0
    %556 = vmatpush1.msra.mxu0 0.0
    %557 = vmatprep.subr.mxu0 0.0
    %558 = vmatpush1.msra.mxu0 0.0
    %559 = vmatprep.subr.mxu0 0.0
    %560 = vmatpush1.msra.mxu0 0.0
    %561 = vmatprep.subr.mxu0 0.0
    %562 = vmatpush1.msra.mxu0 0.0
    %563 = vmatprep.subr.mxu0 0.0
    %564 = vmatpush1.msra.mxu0 0.0
    %565 = vmatprep.subr.mxu0 0.0
    %566 = vmatpush1.msra.mxu0 0.0
    %567 = vmatprep.subr.mxu0 0.0
    %568 = vmatpush1.msra.mxu0 0.0
    %569 = vmatprep.subr.mxu0 0.0
    %570 = vmatpush1.msra.mxu0 0.0
    %571 = vmatprep.subr.mxu0 0.0
    %572 = vmatpush1.msra.mxu0 0.0
    %573 = vmatprep.subr.mxu0 0.0
    %574 = vmatpush1.msra.mxu0 0.0
    %575 = vmatprep.subr.mxu0 0.0
    %576 = vmatpush1.msra.mxu0 0.0
    %577 = vmatprep.subr.mxu0 0.0
    %578 = vmatpush1.msra.mxu0 0.0
    %579 = vmatprep.subr.mxu0 0.0
    %580 = vmatpush1.msra.mxu0 0.0
    %581 = vmatprep.mubr.f32.mxu0 0.0
    %582 = vmatmul.mubr.f32.gmra.mrb[0].mxu0 %v513
    %v583 = vpop.f32.mrb[0].mxu0
    %v584 = vadd.f32 0.0, %v583
    %v585 = vpop.f32.mrb[0].mxu0
    %586 = vmatprep.mubr.f32.mxu0 0.0
    %587 = vmatmul.mubr.f32.gmra.mrb[0].mxu0 %v515
    %v588 = vpop.f32.mrb[0].mxu0
    %v589 = vadd.f32 0.0, %v588
    %v590 = vpop.f32.mrb[0].mxu0
    %591 = vdwg.mxu0
    %v592 = vlaneseq
    %v593 = vshrl.u32 %v592, 7
    %v594 = vsub.s32 2, %v593
    %v595 = vrot.slane %v467, %v594
    %v596 = vmul.f32 %v584, %v595
    %v597 = vmul.f32 %v589, %v595
    %v598 = vsub.f32 %v467, %v596
    %v599 = vsub.f32 %v468, %v597
    %v600 = vlaneseq
    %v601 = vshrl.u32 %v600, 7
    %v602 = vsub.s32 2, %v601
    %v603 = vrot.slane %v487, %v602
    %605 = vrot.lane.b32.xlu0 %v603, 16
    %v606 = vpop.permute.xlu0 %605
    %v608 = vmul.f32 %v505, %v606
    %v609 = vmul.f32 %v506, %v606
    %612 = vrot.lane.b32.xlu0 %v608, 112
    %v613 = vpop.permute.xlu0 %612
    %614 = vrot.lane.b32.xlu0 %v609, 112
    %v615 = vpop.permute.xlu0 %614
    %v618 = vsub.f32 %v487, %v613
    %v619 = vsub.f32 %v488, %v615
    %v620 = vrcp.pop %v598
    %v621 = vmul.f32 %v598, %v620
    %v622 = vsub.f32 2.0, %v621
    %v623 = vmul.f32 %v620, %v622
    %vm624 = vcmp.eq.s32.totalorder %v41, 3
    %vm625 = vcmp.eq.s32.totalorder %v42, 3
    %v626 = vsel %vm624, 1, 0
    %v627 = vsel %vm625, 1, 0
    %v628 = vcvt.s32.f32 %v626
    %v629 = vcvt.s32.f32 %v627
    %v630 = vsub.f32 %v598, %v628
    %v631 = vsub.f32 %v599, %v629
    %v632 = vlaneseq
    %v633 = vshrl.u32 %v632, 7
    %v634 = vsub.s32 3, %v633
    %v635 = vrot.slane %v623, %v634
    %v636 = vmul.f32 %v630, %v635
    %v637 = vmul.f32 %v631, %v635
    %640 = vrot.lane.b32.xlu0 %v636, 104
    %v641 = vpop.permute.xlu0 %640
    %642 = vrot.lane.b32.xlu0 %v637, 104
    %v643 = vpop.permute.xlu0 %642
    %v644 = vsel %vm75, %v641, 0
    %v646 = vsel %vm75, %v643, 0
    %648 = vmatprep.subr.mxu0 0.0
    %649 = vmatpush1.msra.mxu0 %v21
    %650 = vmatprep.subr.mxu0 0.0
    %651 = vmatpush1.msra.mxu0 0.0
    %652 = vmatprep.subr.mxu0 0.0
    %653 = vmatpush1.msra.mxu0 0.0
    %654 = vmatprep.subr.mxu0 0.0
    %655 = vmatpush1.msra.mxu0 0.0
    %656 = vmatprep.subr.mxu0 0.0
    %657 = vmatpush1.msra.mxu0 0.0
    %658 = vmatprep.subr.mxu0 0.0
    %659 = vmatpush1.msra.mxu0 0.0
    %660 = vmatprep.subr.mxu0 0.0
    %661 = vmatpush1.msra.mxu0 0.0
    %662 = vmatprep.subr.mxu0 0.0
    %663 = vmatpush1.msra.mxu0 0.0
    %664 = vmatprep.subr.mxu0 0.0
    %665 = vmatpush1.msra.mxu0 0.0
    %666 = vmatprep.subr.mxu0 0.0
    %667 = vmatpush1.msra.mxu0 0.0
    %668 = vmatprep.subr.mxu0 0.0
    %669 = vmatpush1.msra.mxu0 0.0
    %670 = vmatprep.subr.mxu0 0.0
    %671 = vmatpush1.msra.mxu0 0.0
    %672 = vmatprep.subr.mxu0 0.0
    %673 = vmatpush1.msra.mxu0 0.0
    %674 = vmatprep.subr.mxu0 0.0
    %675 = vmatpush1.msra.mxu0 0.0
    %676 = vmatprep.subr.mxu0 0.0
    %677 = vmatpush1.msra.mxu0 0.0
    %678 = vmatprep.subr.mxu0 0.0
    %679 = vmatpush1.msra.mxu0 0.0
    %680 = vmatprep.subr.mxu0 0.0
    %681 = vmatpush1.msra.mxu0 0.0
    %682 = vmatprep.subr.mxu0 0.0
    %683 = vmatpush1.msra.mxu0 0.0
    %684 = vmatprep.subr.mxu0 0.0
    %685 = vmatpush1.msra.mxu0 0.0
    %686 = vmatprep.subr.mxu0 0.0
    %687 = vmatpush1.msra.mxu0 0.0
    %688 = vmatprep.subr.mxu0 0.0
    %689 = vmatpush1.msra.mxu0 0.0
    %690 = vmatprep.subr.mxu0 0.0
    %691 = vmatpush1.msra.mxu0 0.0
    %692 = vmatprep.subr.mxu0 0.0
    %693 = vmatpush1.msra.mxu0 0.0
    %694 = vmatprep.subr.mxu0 0.0
    %695 = vmatpush1.msra.mxu0 0.0
    %696 = vmatprep.subr.mxu0 0.0
    %697 = vmatpush1.msra.mxu0 0.0
    %698 = vmatprep.subr.mxu0 0.0
    %699 = vmatpush1.msra.mxu0 0.0
    %700 = vmatprep.subr.mxu0 0.0
    %701 = vmatpush1.msra.mxu0 0.0
    %702 = vmatprep.subr.mxu0 0.0
    %703 = vmatpush1.msra.mxu0 0.0
    %704 = vmatprep.subr.mxu0 0.0
    %705 = vmatpush1.msra.mxu0 0.0
    %706 = vmatprep.subr.mxu0 0.0
    %707 = vmatpush1.msra.mxu0 0.0
    %708 = vmatprep.subr.mxu0 0.0
    %709 = vmatpush1.msra.mxu0 0.0
    %710 = vmatprep.subr.mxu0 0.0
    %711 = vmatpush1.msra.mxu0 0.0
    %712 = vmatprep.mubr.f32.mxu0 0.0
    %713 = vmatmul.mubr.f32.gmra.mrb[0].mxu0 %v644
    %v714 = vpop.f32.mrb[0].mxu0
    %v715 = vadd.f32 0.0, %v714
    %v716 = vpop.f32.mrb[0].mxu0
    %717 = vmatprep.mubr.f32.mxu0 0.0
    %718 = vmatmul.mubr.f32.gmra.mrb[0].mxu0 %v646
    %v719 = vpop.f32.mrb[0].mxu0
    %v720 = vadd.f32 0.0, %v719
    %v721 = vpop.f32.mrb[0].mxu0
    %722 = vdwg.mxu0
    %v723 = vlaneseq
    %v724 = vshrl.u32 %v723, 7
    %v725 = vsub.s32 3, %v724
    %v726 = vrot.slane %v598, %v725
    %v727 = vmul.f32 %v715, %v726
    %v728 = vmul.f32 %v720, %v726
    %v729 = vsub.f32 %v598, %v727
    %v730 = vsub.f32 %v599, %v728
    %v731 = vlaneseq
    %v732 = vshrl.u32 %v731, 7
    %v733 = vsub.s32 3, %v732
    %v734 = vrot.slane %v618, %v733
    %736 = vrot.lane.b32.xlu0 %v734, 24
    %v737 = vpop.permute.xlu0 %736
    %v739 = vmul.f32 %v636, %v737
    %v740 = vmul.f32 %v637, %v737
    %743 = vrot.lane.b32.xlu0 %v739, 104
    %v744 = vpop.permute.xlu0 %743
    %745 = vrot.lane.b32.xlu0 %v740, 104
    %v746 = vpop.permute.xlu0 %745
    %v749 = vsub.f32 %v618, %v744
    %v750 = vsub.f32 %v619, %v746
    %v751 = vrcp.pop %v729
    %v752 = vmul.f32 %v729, %v751
    %v753 = vsub.f32 2.0, %v752
    %v754 = vmul.f32 %v751, %v753
    %vm755 = vcmp.eq.s32.totalorder %v41, 4
    %vm756 = vcmp.eq.s32.totalorder %v42, 4
    %v757 = vsel %vm755, 1, 0
    %v758 = vsel %vm756, 1, 0
    %v759 = vcvt.s32.f32 %v757
    %v760 = vcvt.s32.f32 %v758
    %v761 = vsub.f32 %v729, %v759
    %v762 = vsub.f32 %v730, %v760
    %v763 = vlaneseq
    %v764 = vshrl.u32 %v763, 7
    %v765 = vsub.s32 4, %v764
    %v766 = vrot.slane %v754, %v765
    %v767 = vmul.f32 %v761, %v766
    %v768 = vmul.f32 %v762, %v766
    %771 = vrot.lane.b32.xlu0 %v767, 96
    %v772 = vpop.permute.xlu0 %771
    %773 = vrot.lane.b32.xlu0 %v768, 96
    %v774 = vpop.permute.xlu0 %773
    %v775 = vsel %vm75, %v772, 0
    %v777 = vsel %vm75, %v774, 0
    %779 = vmatprep.subr.mxu0 0.0
    %780 = vmatpush1.msra.mxu0 %v21
    %781 = vmatprep.subr.mxu0 0.0
    %782 = vmatpush1.msra.mxu0 0.0
    %783 = vmatprep.subr.mxu0 0.0
    %784 = vmatpush1.msra.mxu0 0.0
    %785 = vmatprep.subr.mxu0 0.0
    %786 = vmatpush1.msra.mxu0 0.0
    %787 = vmatprep.subr.mxu0 0.0
    %788 = vmatpush1.msra.mxu0 0.0
    %789 = vmatprep.subr.mxu0 0.0
    %790 = vmatpush1.msra.mxu0 0.0
    %791 = vmatprep.subr.mxu0 0.0
    %792 = vmatpush1.msra.mxu0 0.0
    %793 = vmatprep.subr.mxu0 0.0
    %794 = vmatpush1.msra.mxu0 0.0
    %795 = vmatprep.subr.mxu0 0.0
    %796 = vmatpush1.msra.mxu0 0.0
    %797 = vmatprep.subr.mxu0 0.0
    %798 = vmatpush1.msra.mxu0 0.0
    %799 = vmatprep.subr.mxu0 0.0
    %800 = vmatpush1.msra.mxu0 0.0
    %801 = vmatprep.subr.mxu0 0.0
    %802 = vmatpush1.msra.mxu0 0.0
    %803 = vmatprep.subr.mxu0 0.0
    %804 = vmatpush1.msra.mxu0 0.0
    %805 = vmatprep.subr.mxu0 0.0
    %806 = vmatpush1.msra.mxu0 0.0
    %807 = vmatprep.subr.mxu0 0.0
    %808 = vmatpush1.msra.mxu0 0.0
    %809 = vmatprep.subr.mxu0 0.0
    %810 = vmatpush1.msra.mxu0 0.0
    %811 = vmatprep.subr.mxu0 0.0
    %812 = vmatpush1.msra.mxu0 0.0
    %813 = vmatprep.subr.mxu0 0.0
    %814 = vmatpush1.msra.mxu0 0.0
    %815 = vmatprep.subr.mxu0 0.0
    %816 = vmatpush1.msra.mxu0 0.0
    %817 = vmatprep.subr.mxu0 0.0
    %818 = vmatpush1.msra.mxu0 0.0
    %819 = vmatprep.subr.mxu0 0.0
    %820 = vmatpush1.msra.mxu0 0.0
    %821 = vmatprep.subr.mxu0 0.0
    %822 = vmatpush1.msra.mxu0 0.0
    %823 = vmatprep.subr.mxu0 0.0
    %824 = vmatpush1.msra.mxu0 0.0
    %825 = vmatprep.subr.mxu0 0.0
    %826 = vmatpush1.msra.mxu0 0.0
    %827 = vmatprep.subr.mxu0 0.0
    %828 = vmatpush1.msra.mxu0 0.0
    %829 = vmatprep.subr.mxu0 0.0
    %830 = vmatpush1.msra.mxu0 0.0
    %831 = vmatprep.subr.mxu0 0.0
    %832 = vmatpush1.msra.mxu0 0.0
    %833 = vmatprep.subr.mxu0 0.0
    %834 = vmatpush1.msra.mxu0 0.0
    %835 = vmatprep.subr.mxu0 0.0
    %836 = vmatpush1.msra.mxu0 0.0
    %837 = vmatprep.subr.mxu0 0.0
    %838 = vmatpush1.msra.mxu0 0.0
    %839 = vmatprep.subr.mxu0 0.0
    %840 = vmatpush1.msra.mxu0 0.0
    %841 = vmatprep.subr.mxu0 0.0
    %842 = vmatpush1.msra.mxu0 0.0
    %843 = vmatprep.mubr.f32.mxu0 0.0
    %844 = vmatmul.mubr.f32.gmra.mrb[0].mxu0 %v775
    %v845 = vpop.f32.mrb[0].mxu0
    %v846 = vadd.f32 0.0, %v845
    %v847 = vpop.f32.mrb[0].mxu0
    %848 = vmatprep.mubr.f32.mxu0 0.0
    %849 = vmatmul.mubr.f32.gmra.mrb[0].mxu0 %v777
    %v850 = vpop.f32.mrb[0].mxu0
    %v851 = vadd.f32 0.0, %v850
    %v852 = vpop.f32.mrb[0].mxu0
    %853 = vdwg.mxu0
    %v854 = vlaneseq
    %v855 = vshrl.u32 %v854, 7
    %v856 = vsub.s32 4, %v855
    %v857 = vrot.slane %v729, %v856
    %v858 = vmul.f32 %v846, %v857
    %v859 = vmul.f32 %v851, %v857
    %v860 = vsub.f32 %v729, %v858
    %v861 = vsub.f32 %v730, %v859
    %v862 = vlaneseq
    %v863 = vshrl.u32 %v862, 7
    %v864 = vsub.s32 4, %v863
    %v865 = vrot.slane %v749, %v864
    %867 = vrot.lane.b32.xlu0 %v865, 32
    %v868 = vpop.permute.xlu0 %867
    %v870 = vmul.f32 %v767, %v868
    %v871 = vmul.f32 %v768, %v868
    %874 = vrot.lane.b32.xlu0 %v870, 96
    %v875 = vpop.permute.xlu0 %874
    %876 = vrot.lane.b32.xlu0 %v871, 96
    %v877 = vpop.permute.xlu0 %876
    %v880 = vsub.f32 %v749, %v875
    %v881 = vsub.f32 %v750, %v877
    %v882 = vrcp.pop %v860
    %v883 = vmul.f32 %v860, %v882
    %v884 = vsub.f32 2.0, %v883
    %v885 = vmul.f32 %v882, %v884
    %vm886 = vcmp.eq.s32.totalorder %v41, 5
    %vm887 = vcmp.eq.s32.totalorder %v42, 5
    %v888 = vsel %vm886, 1, 0
    %v889 = vsel %vm887, 1, 0
    %v890 = vcvt.s32.f32 %v888
    %v891 = vcvt.s32.f32 %v889
    %v892 = vsub.f32 %v860, %v890
    %v893 = vsub.f32 %v861, %v891
    %v894 = vlaneseq
    %v895 = vshrl.u32 %v894, 7
    %v896 = vsub.s32 5, %v895
    %v897 = vrot.slane %v885, %v896
    %v898 = vmul.f32 %v892, %v897
    %v899 = vmul.f32 %v893, %v897
    %902 = vrot.lane.b32.xlu0 %v898, 88
    %v903 = vpop.permute.xlu0 %902
    %904 = vrot.lane.b32.xlu0 %v899, 88
    %v905 = vpop.permute.xlu0 %904
    %v906 = vsel %vm75, %v903, 0
    %v908 = vsel %vm75, %v905, 0
    %910 = vmatprep.subr.mxu0 0.0
    %911 = vmatpush1.msra.mxu0 %v21
    %912 = vmatprep.subr.mxu0 0.0
    %913 = vmatpush1.msra.mxu0 0.0
    %914 = vmatprep.subr.mxu0 0.0
    %915 = vmatpush1.msra.mxu0 0.0
    %916 = vmatprep.subr.mxu0 0.0
    %917 = vmatpush1.msra.mxu0 0.0
    %918 = vmatprep.subr.mxu0 0.0
    %919 = vmatpush1.msra.mxu0 0.0
    %920 = vmatprep.subr.mxu0 0.0
    %921 = vmatpush1.msra.mxu0 0.0
    %922 = vmatprep.subr.mxu0 0.0
    %923 = vmatpush1.msra.mxu0 0.0
    %924 = vmatprep.subr.mxu0 0.0
    %925 = vmatpush1.msra.mxu0 0.0
    %926 = vmatprep.subr.mxu0 0.0
    %927 = vmatpush1.msra.mxu0 0.0
    %928 = vmatprep.subr.mxu0 0.0
    %929 = vmatpush1.msra.mxu0 0.0
    %930 = vmatprep.subr.mxu0 0.0
    %931 = vmatpush1.msra.mxu0 0.0
    %932 = vmatprep.subr.mxu0 0.0
    %933 = vmatpush1.msra.mxu0 0.0
    %934 = vmatprep.subr.mxu0 0.0
    %935 = vmatpush1.msra.mxu0 0.0
    %936 = vmatprep.subr.mxu0 0.0
    %937 = vmatpush1.msra.mxu0 0.0
    %938 = vmatprep.subr.mxu0 0.0
    %939 = vmatpush1.msra.mxu0 0.0
    %940 = vmatprep.subr.mxu0 0.0
    %941 = vmatpush1.msra.mxu0 0.0
    %942 = vmatprep.subr.mxu0 0.0
    %943 = vmatpush1.msra.mxu0 0.0
    %944 = vmatprep.subr.mxu0 0.0
    %945 = vmatpush1.msra.mxu0 0.0
    %946 = vmatprep.subr.mxu0 0.0
    %947 = vmatpush1.msra.mxu0 0.0
    %948 = vmatprep.subr.mxu0 0.0
    %949 = vmatpush1.msra.mxu0 0.0
    %950 = vmatprep.subr.mxu0 0.0
    %951 = vmatpush1.msra.mxu0 0.0
    %952 = vmatprep.subr.mxu0 0.0
    %953 = vmatpush1.msra.mxu0 0.0
    %954 = vmatprep.subr.mxu0 0.0
    %955 = vmatpush1.msra.mxu0 0.0
    %956 = vmatprep.subr.mxu0 0.0
    %957 = vmatpush1.msra.mxu0 0.0
    %958 = vmatprep.subr.mxu0 0.0
    %959 = vmatpush1.msra.mxu0 0.0
    %960 = vmatprep.subr.mxu0 0.0
    %961 = vmatpush1.msra.mxu0 0.0
    %962 = vmatprep.subr.mxu0 0.0
    %963 = vmatpush1.msra.mxu0 0.0
    %964 = vmatprep.subr.mxu0 0.0
    %965 = vmatpush1.msra.mxu0 0.0
    %966 = vmatprep.subr.mxu0 0.0
    %967 = vmatpush1.msra.mxu0 0.0
    %968 = vmatprep.subr.mxu0 0.0
    %969 = vmatpush1.msra.mxu0 0.0
    %970 = vmatprep.subr.mxu0 0.0
    %971 = vmatpush1.msra.mxu0 0.0
    %972 = vmatprep.subr.mxu0 0.0
    %973 = vmatpush1.msra.mxu0 0.0
    %974 = vmatprep.mubr.f32.mxu0 0.0
    %975 = vmatmul.mubr.f32.gmra.mrb[0].mxu0 %v906
    %v976 = vpop.f32.mrb[0].mxu0
    %v977 = vadd.f32 0.0, %v976
    %v978 = vpop.f32.mrb[0].mxu0
    %979 = vmatprep.mubr.f32.mxu0 0.0
    %980 = vmatmul.mubr.f32.gmra.mrb[0].mxu0 %v908
    %v981 = vpop.f32.mrb[0].mxu0
    %v982 = vadd.f32 0.0, %v981
    %v983 = vpop.f32.mrb[0].mxu0
    %984 = vdwg.mxu0
    %v985 = vlaneseq
    %v986 = vshrl.u32 %v985, 7
    %v987 = vsub.s32 5, %v986
    %v988 = vrot.slane %v860, %v987
    %v989 = vmul.f32 %v977, %v988
    %v990 = vmul.f32 %v982, %v988
    %v991 = vsub.f32 %v860, %v989
    %v992 = vsub.f32 %v861, %v990
    %v993 = vlaneseq
    %v994 = vshrl.u32 %v993, 7
    %v995 = vsub.s32 5, %v994
    %v996 = vrot.slane %v880, %v995
    %998 = vrot.lane.b32.xlu0 %v996, 40
    %v999 = vpop.permute.xlu0 %998
    %v1001 = vmul.f32 %v898, %v999
    %v1002 = vmul.f32 %v899, %v999
    %1005 = vrot.lane.b32.xlu0 %v1001, 88
    %v1006 = vpop.permute.xlu0 %1005
    %1007 = vrot.lane.b32.xlu0 %v1002, 88
    %v1008 = vpop.permute.xlu0 %1007
    %v1011 = vsub.f32 %v880, %v1006
    %v1012 = vsub.f32 %v881, %v1008
    %v1013 = vrcp.pop %v991
    %v1014 = vmul.f32 %v991, %v1013
    %v1015 = vsub.f32 2.0, %v1014
    %v1016 = vmul.f32 %v1013, %v1015
    %vm1017 = vcmp.eq.s32.totalorder %v41, 6
    %vm1018 = vcmp.eq.s32.totalorder %v42, 6
    %v1019 = vsel %vm1017, 1, 0
    %v1020 = vsel %vm1018, 1, 0
    %v1021 = vcvt.s32.f32 %v1019
    %v1022 = vcvt.s32.f32 %v1020
    %v1023 = vsub.f32 %v991, %v1021
    %v1024 = vsub.f32 %v992, %v1022
    %v1025 = vlaneseq
    %v1026 = vshrl.u32 %v1025, 7
    %v1027 = vsub.s32 6, %v1026
    %v1028 = vrot.slane %v1016, %v1027
    %v1029 = vmul.f32 %v1023, %v1028
    %v1030 = vmul.f32 %v1024, %v1028
    %1033 = vrot.lane.b32.xlu0 %v1029, 80
    %v1034 = vpop.permute.xlu0 %1033
    %1035 = vrot.lane.b32.xlu0 %v1030, 80
    %v1036 = vpop.permute.xlu0 %1035
    %v1037 = vsel %vm75, %v1034, 0
    %v1039 = vsel %vm75, %v1036, 0
    %1041 = vmatprep.subr.mxu0 0.0
    %1042 = vmatpush1.msra.mxu0 %v21
    %1043 = vmatprep.subr.mxu0 0.0
    %1044 = vmatpush1.msra.mxu0 0.0
    %1045 = vmatprep.subr.mxu0 0.0
    %1046 = vmatpush1.msra.mxu0 0.0
    %1047 = vmatprep.subr.mxu0 0.0
    %1048 = vmatpush1.msra.mxu0 0.0
    %1049 = vmatprep.subr.mxu0 0.0
    %1050 = vmatpush1.msra.mxu0 0.0
    %1051 = vmatprep.subr.mxu0 0.0
    %1052 = vmatpush1.msra.mxu0 0.0
    %1053 = vmatprep.subr.mxu0 0.0
    %1054 = vmatpush1.msra.mxu0 0.0
    %1055 = vmatprep.subr.mxu0 0.0
    %1056 = vmatpush1.msra.mxu0 0.0
    %1057 = vmatprep.subr.mxu0 0.0
    %1058 = vmatpush1.msra.mxu0 0.0
    %1059 = vmatprep.subr.mxu0 0.0
    %1060 = vmatpush1.msra.mxu0 0.0
    %1061 = vmatprep.subr.mxu0 0.0
    %1062 = vmatpush1.msra.mxu0 0.0
    %1063 = vmatprep.subr.mxu0 0.0
    %1064 = vmatpush1.msra.mxu0 0.0
    %1065 = vmatprep.subr.mxu0 0.0
    %1066 = vmatpush1.msra.mxu0 0.0
    %1067 = vmatprep.subr.mxu0 0.0
    %1068 = vmatpush1.msra.mxu0 0.0
    %1069 = vmatprep.subr.mxu0 0.0
    %1070 = vmatpush1.msra.mxu0 0.0
    %1071 = vmatprep.subr.mxu0 0.0
    %1072 = vmatpush1.msra.mxu0 0.0
    %1073 = vmatprep.subr.mxu0 0.0
    %1074 = vmatpush1.msra.mxu0 0.0
    %1075 = vmatprep.subr.mxu0 0.0
    %1076 = vmatpush1.msra.mxu0 0.0
    %1077 = vmatprep.subr.mxu0 0.0
    %1078 = vmatpush1.msra.mxu0 0.0
    %1079 = vmatprep.subr.mxu0 0.0
    %1080 = vmatpush1.msra.mxu0 0.0
    %1081 = vmatprep.subr.mxu0 0.0
    %1082 = vmatpush1.msra.mxu0 0.0
    %1083 = vmatprep.subr.mxu0 0.0
    %1084 = vmatpush1.msra.mxu0 0.0
    %1085 = vmatprep.subr.mxu0 0.0
    %1086 = vmatpush1.msra.mxu0 0.0
    %1087 = vmatprep.subr.mxu0 0.0
    %1088 = vmatpush1.msra.mxu0 0.0
    %1089 = vmatprep.subr.mxu0 0.0
    %1090 = vmatpush1.msra.mxu0 0.0
    %1091 = vmatprep.subr.mxu0 0.0
    %1092 = vmatpush1.msra.mxu0 0.0
    %1093 = vmatprep.subr.mxu0 0.0
    %1094 = vmatpush1.msra.mxu0 0.0
    %1095 = vmatprep.subr.mxu0 0.0
    %1096 = vmatpush1.msra.mxu0 0.0
    %1097 = vmatprep.subr.mxu0 0.0
    %1098 = vmatpush1.msra.mxu0 0.0
    %1099 = vmatprep.subr.mxu0 0.0
    %1100 = vmatpush1.msra.mxu0 0.0
    %1101 = vmatprep.subr.mxu0 0.0
    %1102 = vmatpush1.msra.mxu0 0.0
    %1103 = vmatprep.subr.mxu0 0.0
    %1104 = vmatpush1.msra.mxu0 0.0
    %1105 = vmatprep.mubr.f32.mxu0 0.0
    %1106 = vmatmul.mubr.f32.gmra.mrb[0].mxu0 %v1037
    %v1107 = vpop.f32.mrb[0].mxu0
    %v1108 = vadd.f32 0.0, %v1107
    %v1109 = vpop.f32.mrb[0].mxu0
    %1110 = vmatprep.mubr.f32.mxu0 0.0
    %1111 = vmatmul.mubr.f32.gmra.mrb[0].mxu0 %v1039
    %v1112 = vpop.f32.mrb[0].mxu0
    %v1113 = vadd.f32 0.0, %v1112
    %v1114 = vpop.f32.mrb[0].mxu0
    %1115 = vdwg.mxu0
    %v1116 = vlaneseq
    %v1117 = vshrl.u32 %v1116, 7
    %v1118 = vsub.s32 6, %v1117
    %v1119 = vrot.slane %v991, %v1118
    %v1120 = vmul.f32 %v1108, %v1119
    %v1121 = vmul.f32 %v1113, %v1119
    %v1122 = vsub.f32 %v991, %v1120
    %v1123 = vsub.f32 %v992, %v1121
    %v1124 = vlaneseq
    %v1125 = vshrl.u32 %v1124, 7
    %v1126 = vsub.s32 6, %v1125
    %v1127 = vrot.slane %v1011, %v1126
    %1129 = vrot.lane.b32.xlu0 %v1127, 48
    %v1130 = vpop.permute.xlu0 %1129
    %v1132 = vmul.f32 %v1029, %v1130
    %v1133 = vmul.f32 %v1030, %v1130
    %1136 = vrot.lane.b32.xlu0 %v1132, 80
    %v1137 = vpop.permute.xlu0 %1136
    %1138 = vrot.lane.b32.xlu0 %v1133, 80
    %v1139 = vpop.permute.xlu0 %1138
    %v1142 = vsub.f32 %v1011, %v1137
    %v1143 = vsub.f32 %v1012, %v1139
    %v1144 = vrcp.pop %v1122
    %v1145 = vmul.f32 %v1122, %v1144
    %v1146 = vsub.f32 2.0, %v1145
    %v1147 = vmul.f32 %v1144, %v1146
    %vm1148 = vcmp.eq.s32.totalorder %v41, 7
    %vm1149 = vcmp.eq.s32.totalorder %v42, 7
    %v1150 = vsel %vm1148, 1, 0
    %v1151 = vsel %vm1149, 1, 0
    %v1152 = vcvt.s32.f32 %v1150
    %v1153 = vcvt.s32.f32 %v1151
    %v1154 = vsub.f32 %v1122, %v1152
    %v1155 = vsub.f32 %v1123, %v1153
    %v1156 = vlaneseq
    %v1157 = vshrl.u32 %v1156, 7
    %v1158 = vsub.s32 7, %v1157
    %v1159 = vrot.slane %v1147, %v1158
    %v1160 = vmul.f32 %v1154, %v1159
    %v1161 = vmul.f32 %v1155, %v1159
    %1164 = vrot.lane.b32.xlu0 %v1160, 72
    %v1165 = vpop.permute.xlu0 %1164
    %1166 = vrot.lane.b32.xlu0 %v1161, 72
    %v1167 = vpop.permute.xlu0 %1166
    %v1168 = vsel %vm75, %v1165, 0
    %v1170 = vsel %vm75, %v1167, 0
    %1172 = vmatprep.subr.mxu0 0.0
    %1173 = vmatpush1.msra.mxu0 %v21
    %1174 = vmatprep.subr.mxu0 0.0
    %1175 = vmatpush1.msra.mxu0 0.0
    %1176 = vmatprep.subr.mxu0 0.0
    %1177 = vmatpush1.msra.mxu0 0.0
    %1178 = vmatprep.subr.mxu0 0.0
    %1179 = vmatpush1.msra.mxu0 0.0
    %1180 = vmatprep.subr.mxu0 0.0
    %1181 = vmatpush1.msra.mxu0 0.0
    %1182 = vmatprep.subr.mxu0 0.0
    %1183 = vmatpush1.msra.mxu0 0.0
    %1184 = vmatprep.subr.mxu0 0.0
    %1185 = vmatpush1.msra.mxu0 0.0
    %1186 = vmatprep.subr.mxu0 0.0
    %1187 = vmatpush1.msra.mxu0 0.0
    %1188 = vmatprep.subr.mxu0 0.0
    %1189 = vmatpush1.msra.mxu0 0.0
    %1190 = vmatprep.subr.mxu0 0.0
    %1191 = vmatpush1.msra.mxu0 0.0
    %1192 = vmatprep.subr.mxu0 0.0
    %1193 = vmatpush1.msra.mxu0 0.0
    %1194 = vmatprep.subr.mxu0 0.0
    %1195 = vmatpush1.msra.mxu0 0.0
    %1196 = vmatprep.subr.mxu0 0.0
    %1197 = vmatpush1.msra.mxu0 0.0
    %1198 = vmatprep.subr.mxu0 0.0
    %1199 = vmatpush1.msra.mxu0 0.0
    %1200 = vmatprep.subr.mxu0 0.0
    %1201 = vmatpush1.msra.mxu0 0.0
    %1202 = vmatprep.subr.mxu0 0.0
    %1203 = vmatpush1.msra.mxu0 0.0
    %1204 = vmatprep.subr.mxu0 0.0
    %1205 = vmatpush1.msra.mxu0 0.0
    %1206 = vmatprep.subr.mxu0 0.0
    %1207 = vmatpush1.msra.mxu0 0.0
    %1208 = vmatprep.subr.mxu0 0.0
    %1209 = vmatpush1.msra.mxu0 0.0
    %1210 = vmatprep.subr.mxu0 0.0
    %1211 = vmatpush1.msra.mxu0 0.0
    %1212 = vmatprep.subr.mxu0 0.0
    %1213 = vmatpush1.msra.mxu0 0.0
    %1214 = vmatprep.subr.mxu0 0.0
    %1215 = vmatpush1.msra.mxu0 0.0
    %1216 = vmatprep.subr.mxu0 0.0
    %1217 = vmatpush1.msra.mxu0 0.0
    %1218 = vmatprep.subr.mxu0 0.0
    %1219 = vmatpush1.msra.mxu0 0.0
    %1220 = vmatprep.subr.mxu0 0.0
    %1221 = vmatpush1.msra.mxu0 0.0
    %1222 = vmatprep.subr.mxu0 0.0
    %1223 = vmatpush1.msra.mxu0 0.0
    %1224 = vmatprep.subr.mxu0 0.0
    %1225 = vmatpush1.msra.mxu0 0.0
    %1226 = vmatprep.subr.mxu0 0.0
    %1227 = vmatpush1.msra.mxu0 0.0
    %1228 = vmatprep.subr.mxu0 0.0
    %1229 = vmatpush1.msra.mxu0 0.0
    %1230 = vmatprep.subr.mxu0 0.0
    %1231 = vmatpush1.msra.mxu0 0.0
    %1232 = vmatprep.subr.mxu0 0.0
    %1233 = vmatpush1.msra.mxu0 0.0
    %1234 = vmatprep.subr.mxu0 0.0
    %1235 = vmatpush1.msra.mxu0 0.0
    %1236 = vmatprep.mubr.f32.mxu0 0.0
    %1237 = vmatmul.mubr.f32.gmra.mrb[0].mxu0 %v1168
    %v1238 = vpop.f32.mrb[0].mxu0
    %v1239 = vadd.f32 0.0, %v1238
    %v1240 = vpop.f32.mrb[0].mxu0
    %1241 = vmatprep.mubr.f32.mxu0 0.0
    %1242 = vmatmul.mubr.f32.gmra.mrb[0].mxu0 %v1170
    %v1243 = vpop.f32.mrb[0].mxu0
    %v1244 = vadd.f32 0.0, %v1243
    %v1245 = vpop.f32.mrb[0].mxu0
    %1246 = vdwg.mxu0
    %v1247 = vlaneseq
    %v1248 = vshrl.u32 %v1247, 7
    %v1249 = vsub.s32 7, %v1248
    %v1250 = vrot.slane %v1122, %v1249
    %v1251 = vmul.f32 %v1239, %v1250
    %v1252 = vmul.f32 %v1244, %v1250
    %v1253 = vsub.f32 %v1122, %v1251
    %v1254 = vsub.f32 %v1123, %v1252
    %v1255 = vlaneseq
    %v1256 = vshrl.u32 %v1255, 7
    %v1257 = vsub.s32 7, %v1256
    %v1258 = vrot.slane %v1142, %v1257
    %1260 = vrot.lane.b32.xlu0 %v1258, 56
    %v1261 = vpop.permute.xlu0 %1260
    %v1263 = vmul.f32 %v1160, %v1261
    %v1264 = vmul.f32 %v1161, %v1261
    %1267 = vrot.lane.b32.xlu0 %v1263, 72
    %v1268 = vpop.permute.xlu0 %1267
    %1269 = vrot.lane.b32.xlu0 %v1264, 72
    %v1270 = vpop.permute.xlu0 %1269
    %v1273 = vsub.f32 %v1142, %v1268
    %v1274 = vsub.f32 %v1143, %v1270
    %v1275 = vrcp.pop %v1254
    %v1276 = vmul.f32 %v1254, %v1275
    %v1277 = vsub.f32 2.0, %v1276
    %v1278 = vmul.f32 %v1275, %v1277
    %vm1279 = vcmp.eq.s32.totalorder %v41, 8
    %vm1280 = vcmp.eq.s32.totalorder %v42, 8
    %v1281 = vsel %vm1279, 1, 0
    %v1282 = vsel %vm1280, 1, 0
    %v1283 = vcvt.s32.f32 %v1281
    %v1284 = vcvt.s32.f32 %v1282
    %v1285 = vsub.f32 %v1253, %v1283
    %v1286 = vsub.f32 %v1254, %v1284
    %v1287 = vlaneseq
    %v1288 = vshrl.u32 %v1287, 7
    %v1289 = vsub.s32 0, %v1288
    %v1290 = vrot.slane %v1278, %v1289
    %v1291 = vmul.f32 %v1285, %v1290
    %v1292 = vmul.f32 %v1286, %v1290
    %1295 = vrot.lane.b32.xlu0 %v1291, 64
    %v1296 = vpop.permute.xlu0 %1295
    %1297 = vrot.lane.b32.xlu0 %v1292, 64
    %v1298 = vpop.permute.xlu0 %1297
    %v1299 = vsel %vm75, %v1296, 0
    %v1301 = vsel %vm75, %v1298, 0
    %1303 = vmatprep.subr.mxu0 0.0
    %1304 = vmatpush1.msra.mxu0 %v21
    %1305 = vmatprep.subr.mxu0 0.0
    %1306 = vmatpush1.msra.mxu0 0.0
    %1307 = vmatprep.subr.mxu0 0.0
    %1308 = vmatpush1.msra.mxu0 0.0
    %1309 = vmatprep.subr.mxu0 0.0
    %1310 = vmatpush1.msra.mxu0 0.0
    %1311 = vmatprep.subr.mxu0 0.0
    %1312 = vmatpush1.msra.mxu0 0.0
    %1313 = vmatprep.subr.mxu0 0.0
    %1314 = vmatpush1.msra.mxu0 0.0
    %1315 = vmatprep.subr.mxu0 0.0
    %1316 = vmatpush1.msra.mxu0 0.0
    %1317 = vmatprep.subr.mxu0 0.0
    %1318 = vmatpush1.msra.mxu0 0.0
    %1319 = vmatprep.subr.mxu0 0.0
    %1320 = vmatpush1.msra.mxu0 0.0
    %1321 = vmatprep.subr.mxu0 0.0
    %1322 = vmatpush1.msra.mxu0 0.0
    %1323 = vmatprep.subr.mxu0 0.0
    %1324 = vmatpush1.msra.mxu0 0.0
    %1325 = vmatprep.subr.mxu0 0.0
    %1326 = vmatpush1.msra.mxu0 0.0
    %1327 = vmatprep.subr.mxu0 0.0
    %1328 = vmatpush1.msra.mxu0 0.0
    %1329 = vmatprep.subr.mxu0 0.0
    %1330 = vmatpush1.msra.mxu0 0.0
    %1331 = vmatprep.subr.mxu0 0.0
    %1332 = vmatpush1.msra.mxu0 0.0
    %1333 = vmatprep.subr.mxu0 0.0
    %1334 = vmatpush1.msra.mxu0 0.0
    %1335 = vmatprep.subr.mxu0 0.0
    %1336 = vmatpush1.msra.mxu0 0.0
    %1337 = vmatprep.subr.mxu0 0.0
    %1338 = vmatpush1.msra.mxu0 0.0
    %1339 = vmatprep.subr.mxu0 0.0
    %1340 = vmatpush1.msra.mxu0 0.0
    %1341 = vmatprep.subr.mxu0 0.0
    %1342 = vmatpush1.msra.mxu0 0.0
    %1343 = vmatprep.subr.mxu0 0.0
    %1344 = vmatpush1.msra.mxu0 0.0
    %1345 = vmatprep.subr.mxu0 0.0
    %1346 = vmatpush1.msra.mxu0 0.0
    %1347 = vmatprep.subr.mxu0 0.0
    %1348 = vmatpush1.msra.mxu0 0.0
    %1349 = vmatprep.subr.mxu0 0.0
    %1350 = vmatpush1.msra.mxu0 0.0
    %1351 = vmatprep.subr.mxu0 0.0
    %1352 = vmatpush1.msra.mxu0 0.0
    %1353 = vmatprep.subr.mxu0 0.0
    %1354 = vmatpush1.msra.mxu0 0.0
    %1355 = vmatprep.subr.mxu0 0.0
    %1356 = vmatpush1.msra.mxu0 0.0
    %1357 = vmatprep.subr.mxu0 0.0
    %1358 = vmatpush1.msra.mxu0 0.0
    %1359 = vmatprep.subr.mxu0 0.0
    %1360 = vmatpush1.msra.mxu0 0.0
    %1361 = vmatprep.subr.mxu0 0.0
    %1362 = vmatpush1.msra.mxu0 0.0
    %1363 = vmatprep.subr.mxu0 0.0
    %1364 = vmatpush1.msra.mxu0 0.0
    %1365 = vmatprep.subr.mxu0 0.0
    %1366 = vmatpush1.msra.mxu0 0.0
    %1367 = vmatprep.mubr.f32.mxu0 0.0
    %1368 = vmatmul.mubr.f32.gmra.mrb[0].mxu0 %v1299
    %v1369 = vpop.f32.mrb[0].mxu0
    %v1370 = vadd.f32 0.0, %v1369
    %v1371 = vpop.f32.mrb[0].mxu0
    %1372 = vmatprep.mubr.f32.mxu0 0.0
    %1373 = vmatmul.mubr.f32.gmra.mrb[0].mxu0 %v1301
    %v1374 = vpop.f32.mrb[0].mxu0
    %v1375 = vadd.f32 0.0, %v1374
    %v1376 = vpop.f32.mrb[0].mxu0
    %1377 = vdwg.mxu0
    %v1378 = vlaneseq
    %v1379 = vshrl.u32 %v1378, 7
    %v1380 = vsub.s32 0, %v1379
    %v1381 = vrot.slane %v1254, %v1380
    %v1382 = vmul.f32 %v1370, %v1381
    %v1383 = vmul.f32 %v1375, %v1381
    %v1384 = vsub.f32 %v1253, %v1382
    %v1385 = vsub.f32 %v1254, %v1383
    %v1386 = vlaneseq
    %v1387 = vshrl.u32 %v1386, 7
    %v1388 = vsub.s32 0, %v1387
    %v1389 = vrot.slane %v1274, %v1388
    %1391 = vrot.lane.b32.xlu0 %v1389, 64
    %v1392 = vpop.permute.xlu0 %1391
    %v1394 = vmul.f32 %v1291, %v1392
    %v1395 = vmul.f32 %v1292, %v1392
    %1398 = vrot.lane.b32.xlu0 %v1394, 64
    %v1399 = vpop.permute.xlu0 %1398
    %1400 = vrot.lane.b32.xlu0 %v1395, 64
    %v1401 = vpop.permute.xlu0 %1400
    %v1404 = vsub.f32 %v1273, %v1399
    %v1405 = vsub.f32 %v1274, %v1401
    %v1406 = vrcp.pop %v1385
    %v1407 = vmul.f32 %v1385, %v1406
    %v1408 = vsub.f32 2.0, %v1407
    %v1409 = vmul.f32 %v1406, %v1408
    %vm1410 = vcmp.eq.s32.totalorder %v41, 9
    %vm1411 = vcmp.eq.s32.totalorder %v42, 9
    %v1412 = vsel %vm1410, 1, 0
    %v1413 = vsel %vm1411, 1, 0
    %v1414 = vcvt.s32.f32 %v1412
    %v1415 = vcvt.s32.f32 %v1413
    %v1416 = vsub.f32 %v1384, %v1414
    %v1417 = vsub.f32 %v1385, %v1415
    %v1418 = vlaneseq
    %v1419 = vshrl.u32 %v1418, 7
    %v1420 = vsub.s32 1, %v1419
    %v1421 = vrot.slane %v1409, %v1420
    %v1422 = vmul.f32 %v1416, %v1421
    %v1423 = vmul.f32 %v1417, %v1421
    %1426 = vrot.lane.b32.xlu0 %v1422, 56
    %v1427 = vpop.permute.xlu0 %1426
    %1428 = vrot.lane.b32.xlu0 %v1423, 56
    %v1429 = vpop.permute.xlu0 %1428
    %v1430 = vsel %vm75, %v1427, 0
    %v1432 = vsel %vm75, %v1429, 0
    %1434 = vmatprep.subr.mxu0 0.0
    %1435 = vmatpush1.msra.mxu0 %v21
    %1436 = vmatprep.subr.mxu0 0.0
    %1437 = vmatpush1.msra.mxu0 0.0
    %1438 = vmatprep.subr.mxu0 0.0
    %1439 = vmatpush1.msra.mxu0 0.0
    %1440 = vmatprep.subr.mxu0 0.0
    %1441 = vmatpush1.msra.mxu0 0.0
    %1442 = vmatprep.subr.mxu0 0.0
    %1443 = vmatpush1.msra.mxu0 0.0
    %1444 = vmatprep.subr.mxu0 0.0
    %1445 = vmatpush1.msra.mxu0 0.0
    %1446 = vmatprep.subr.mxu0 0.0
    %1447 = vmatpush1.msra.mxu0 0.0
    %1448 = vmatprep.subr.mxu0 0.0
    %1449 = vmatpush1.msra.mxu0 0.0
    %1450 = vmatprep.subr.mxu0 0.0
    %1451 = vmatpush1.msra.mxu0 0.0
    %1452 = vmatprep.subr.mxu0 0.0
    %1453 = vmatpush1.msra.mxu0 0.0
    %1454 = vmatprep.subr.mxu0 0.0
    %1455 = vmatpush1.msra.mxu0 0.0
    %1456 = vmatprep.subr.mxu0 0.0
    %1457 = vmatpush1.msra.mxu0 0.0
    %1458 = vmatprep.subr.mxu0 0.0
    %1459 = vmatpush1.msra.mxu0 0.0
    %1460 = vmatprep.subr.mxu0 0.0
    %1461 = vmatpush1.msra.mxu0 0.0
    %1462 = vmatprep.subr.mxu0 0.0
    %1463 = vmatpush1.msra.mxu0 0.0
    %1464 = vmatprep.subr.mxu0 0.0
    %1465 = vmatpush1.msra.mxu0 0.0
    %1466 = vmatprep.subr.mxu0 0.0
    %1467 = vmatpush1.msra.mxu0 0.0
    %1468 = vmatprep.subr.mxu0 0.0
    %1469 = vmatpush1.msra.mxu0 0.0
    %1470 = vmatprep.subr.mxu0 0.0
    %1471 = vmatpush1.msra.mxu0 0.0
    %1472 = vmatprep.subr.mxu0 0.0
    %1473 = vmatpush1.msra.mxu0 0.0
    %1474 = vmatprep.subr.mxu0 0.0
    %1475 = vmatpush1.msra.mxu0 0.0
    %1476 = vmatprep.subr.mxu0 0.0
    %1477 = vmatpush1.msra.mxu0 0.0
    %1478 = vmatprep.subr.mxu0 0.0
    %1479 = vmatpush1.msra.mxu0 0.0
    %1480 = vmatprep.subr.mxu0 0.0
    %1481 = vmatpush1.msra.mxu0 0.0
    %1482 = vmatprep.subr.mxu0 0.0
    %1483 = vmatpush1.msra.mxu0 0.0
    %1484 = vmatprep.subr.mxu0 0.0
    %1485 = vmatpush1.msra.mxu0 0.0
    %1486 = vmatprep.subr.mxu0 0.0
    %1487 = vmatpush1.msra.mxu0 0.0
    %1488 = vmatprep.subr.mxu0 0.0
    %1489 = vmatpush1.msra.mxu0 0.0
    %1490 = vmatprep.subr.mxu0 0.0
    %1491 = vmatpush1.msra.mxu0 0.0
    %1492 = vmatprep.subr.mxu0 0.0
    %1493 = vmatpush1.msra.mxu0 0.0
    %1494 = vmatprep.subr.mxu0 0.0
    %1495 = vmatpush1.msra.mxu0 0.0
    %1496 = vmatprep.subr.mxu0 0.0
    %1497 = vmatpush1.msra.mxu0 0.0
    %1498 = vmatprep.mubr.f32.mxu0 0.0
    %1499 = vmatmul.mubr.f32.gmra.mrb[0].mxu0 %v1430
    %v1500 = vpop.f32.mrb[0].mxu0
    %v1501 = vadd.f32 0.0, %v1500
    %v1502 = vpop.f32.mrb[0].mxu0
    %1503 = vmatprep.mubr.f32.mxu0 0.0
    %1504 = vmatmul.mubr.f32.gmra.mrb[0].mxu0 %v1432
    %v1505 = vpop.f32.mrb[0].mxu0
    %v1506 = vadd.f32 0.0, %v1505
    %v1507 = vpop.f32.mrb[0].mxu0
    %1508 = vdwg.mxu0
    %v1509 = vlaneseq
    %v1510 = vshrl.u32 %v1509, 7
    %v1511 = vsub.s32 1, %v1510
    %v1512 = vrot.slane %v1385, %v1511
    %v1513 = vmul.f32 %v1501, %v1512
    %v1514 = vmul.f32 %v1506, %v1512
    %v1515 = vsub.f32 %v1384, %v1513
    %v1516 = vsub.f32 %v1385, %v1514
    %v1517 = vlaneseq
    %v1518 = vshrl.u32 %v1517, 7
    %v1519 = vsub.s32 1, %v1518
    %v1520 = vrot.slane %v1405, %v1519
    %1522 = vrot.lane.b32.xlu0 %v1520, 72
    %v1523 = vpop.permute.xlu0 %1522
    %v1525 = vmul.f32 %v1422, %v1523
    %v1526 = vmul.f32 %v1423, %v1523
    %1529 = vrot.lane.b32.xlu0 %v1525, 56
    %v1530 = vpop.permute.xlu0 %1529
    %1531 = vrot.lane.b32.xlu0 %v1526, 56
    %v1532 = vpop.permute.xlu0 %1531
    %v1535 = vsub.f32 %v1404, %v1530
    %v1536 = vsub.f32 %v1405, %v1532
    %v1537 = vrcp.pop %v1516
    %v1538 = vmul.f32 %v1516, %v1537
    %v1539 = vsub.f32 2.0, %v1538
    %v1540 = vmul.f32 %v1537, %v1539
    %vm1541 = vcmp.eq.s32.totalorder %v41, 10
    %vm1542 = vcmp.eq.s32.totalorder %v42, 10
    %v1543 = vsel %vm1541, 1, 0
    %v1544 = vsel %vm1542, 1, 0
    %v1545 = vcvt.s32.f32 %v1543
    %v1546 = vcvt.s32.f32 %v1544
    %v1547 = vsub.f32 %v1515, %v1545
    %v1548 = vsub.f32 %v1516, %v1546
    %v1549 = vlaneseq
    %v1550 = vshrl.u32 %v1549, 7
    %v1551 = vsub.s32 2, %v1550
    %v1552 = vrot.slane %v1540, %v1551
    %v1553 = vmul.f32 %v1547, %v1552
    %v1554 = vmul.f32 %v1548, %v1552
    %1557 = vrot.lane.b32.xlu0 %v1553, 48
    %v1558 = vpop.permute.xlu0 %1557
    %1559 = vrot.lane.b32.xlu0 %v1554, 48
    %v1560 = vpop.permute.xlu0 %1559
    %v1561 = vsel %vm75, %v1558, 0
    %v1563 = vsel %vm75, %v1560, 0
    %1565 = vmatprep.subr.mxu0 0.0
    %1566 = vmatpush1.msra.mxu0 %v21
    %1567 = vmatprep.subr.mxu0 0.0
    %1568 = vmatpush1.msra.mxu0 0.0
    %1569 = vmatprep.subr.mxu0 0.0
    %1570 = vmatpush1.msra.mxu0 0.0
    %1571 = vmatprep.subr.mxu0 0.0
    %1572 = vmatpush1.msra.mxu0 0.0
    %1573 = vmatprep.subr.mxu0 0.0
    %1574 = vmatpush1.msra.mxu0 0.0
    %1575 = vmatprep.subr.mxu0 0.0
    %1576 = vmatpush1.msra.mxu0 0.0
    %1577 = vmatprep.subr.mxu0 0.0
    %1578 = vmatpush1.msra.mxu0 0.0
    %1579 = vmatprep.subr.mxu0 0.0
    %1580 = vmatpush1.msra.mxu0 0.0
    %1581 = vmatprep.subr.mxu0 0.0
    %1582 = vmatpush1.msra.mxu0 0.0
    %1583 = vmatprep.subr.mxu0 0.0
    %1584 = vmatpush1.msra.mxu0 0.0
    %1585 = vmatprep.subr.mxu0 0.0
    %1586 = vmatpush1.msra.mxu0 0.0
    %1587 = vmatprep.subr.mxu0 0.0
    %1588 = vmatpush1.msra.mxu0 0.0
    %1589 = vmatprep.subr.mxu0 0.0
    %1590 = vmatpush1.msra.mxu0 0.0
    %1591 = vmatprep.subr.mxu0 0.0
    %1592 = vmatpush1.msra.mxu0 0.0
    %1593 = vmatprep.subr.mxu0 0.0
    %1594 = vmatpush1.msra.mxu0 0.0
    %1595 = vmatprep.subr.mxu0 0.0
    %1596 = vmatpush1.msra.mxu0 0.0
    %1597 = vmatprep.subr.mxu0 0.0
    %1598 = vmatpush1.msra.mxu0 0.0
    %1599 = vmatprep.subr.mxu0 0.0
    %1600 = vmatpush1.msra.mxu0 0.0
    %1601 = vmatprep.subr.mxu0 0.0
    %1602 = vmatpush1.msra.mxu0 0.0
    %1603 = vmatprep.subr.mxu0 0.0
    %1604 = vmatpush1.msra.mxu0 0.0
    %1605 = vmatprep.subr.mxu0 0.0
    %1606 = vmatpush1.msra.mxu0 0.0
    %1607 = vmatprep.subr.mxu0 0.0
    %1608 = vmatpush1.msra.mxu0 0.0
    %1609 = vmatprep.subr.mxu0 0.0
    %1610 = vmatpush1.msra.mxu0 0.0
    %1611 = vmatprep.subr.mxu0 0.0
    %1612 = vmatpush1.msra.mxu0 0.0
    %1613 = vmatprep.subr.mxu0 0.0
    %1614 = vmatpush1.msra.mxu0 0.0
    %1615 = vmatprep.subr.mxu0 0.0
    %1616 = vmatpush1.msra.mxu0 0.0
    %1617 = vmatprep.subr.mxu0 0.0
    %1618 = vmatpush1.msra.mxu0 0.0
    %1619 = vmatprep.subr.mxu0 0.0
    %1620 = vmatpush1.msra.mxu0 0.0
    %1621 = vmatprep.subr.mxu0 0.0
    %1622 = vmatpush1.msra.mxu0 0.0
    %1623 = vmatprep.subr.mxu0 0.0
    %1624 = vmatpush1.msra.mxu0 0.0
    %1625 = vmatprep.subr.mxu0 0.0
    %1626 = vmatpush1.msra.mxu0 0.0
    %1627 = vmatprep.subr.mxu0 0.0
    %1628 = vmatpush1.msra.mxu0 0.0
    %1629 = vmatprep.mubr.f32.mxu0 0.0
    %1630 = vmatmul.mubr.f32.gmra.mrb[0].mxu0 %v1561
    %v1631 = vpop.f32.mrb[0].mxu0
    %v1632 = vadd.f32 0.0, %v1631
    %v1633 = vpop.f32.mrb[0].mxu0
    %1634 = vmatprep.mubr.f32.mxu0 0.0
    %1635 = vmatmul.mubr.f32.gmra.mrb[0].mxu0 %v1563
    %v1636 = vpop.f32.mrb[0].mxu0
    %v1637 = vadd.f32 0.0, %v1636
    %v1638 = vpop.f32.mrb[0].mxu0
    %1639 = vdwg.mxu0
    %v1640 = vlaneseq
    %v1641 = vshrl.u32 %v1640, 7
    %v1642 = vsub.s32 2, %v1641
    %v1643 = vrot.slane %v1516, %v1642
    %v1644 = vmul.f32 %v1632, %v1643
    %v1645 = vmul.f32 %v1637, %v1643
    %v1646 = vsub.f32 %v1515, %v1644
    %v1647 = vsub.f32 %v1516, %v1645
    %v1648 = vlaneseq
    %v1649 = vshrl.u32 %v1648, 7
    %v1650 = vsub.s32 2, %v1649
    %v1651 = vrot.slane %v1536, %v1650
    %1653 = vrot.lane.b32.xlu0 %v1651, 80
    %v1654 = vpop.permute.xlu0 %1653
    %v1656 = vmul.f32 %v1553, %v1654
    %v1657 = vmul.f32 %v1554, %v1654
    %1660 = vrot.lane.b32.xlu0 %v1656, 48
    %v1661 = vpop.permute.xlu0 %1660
    %1662 = vrot.lane.b32.xlu0 %v1657, 48
    %v1663 = vpop.permute.xlu0 %1662
    %v1666 = vsub.f32 %v1535, %v1661
    %v1667 = vsub.f32 %v1536, %v1663
    %v1668 = vrcp.pop %v1647
    %v1669 = vmul.f32 %v1647, %v1668
    %v1670 = vsub.f32 2.0, %v1669
    %v1671 = vmul.f32 %v1668, %v1670
    %vm1672 = vcmp.eq.s32.totalorder %v41, 11
    %vm1673 = vcmp.eq.s32.totalorder %v42, 11
    %v1674 = vsel %vm1672, 1, 0
    %v1675 = vsel %vm1673, 1, 0
    %v1676 = vcvt.s32.f32 %v1674
    %v1677 = vcvt.s32.f32 %v1675
    %v1678 = vsub.f32 %v1646, %v1676
    %v1679 = vsub.f32 %v1647, %v1677
    %v1680 = vlaneseq
    %v1681 = vshrl.u32 %v1680, 7
    %v1682 = vsub.s32 3, %v1681
    %v1683 = vrot.slane %v1671, %v1682
    %v1684 = vmul.f32 %v1678, %v1683
    %v1685 = vmul.f32 %v1679, %v1683
    %1688 = vrot.lane.b32.xlu0 %v1684, 40
    %v1689 = vpop.permute.xlu0 %1688
    %1690 = vrot.lane.b32.xlu0 %v1685, 40
    %v1691 = vpop.permute.xlu0 %1690
    %v1692 = vsel %vm75, %v1689, 0
    %v1694 = vsel %vm75, %v1691, 0
    %1696 = vmatprep.subr.mxu0 0.0
    %1697 = vmatpush1.msra.mxu0 %v21
    %1698 = vmatprep.subr.mxu0 0.0
    %1699 = vmatpush1.msra.mxu0 0.0
    %1700 = vmatprep.subr.mxu0 0.0
    %1701 = vmatpush1.msra.mxu0 0.0
    %1702 = vmatprep.subr.mxu0 0.0
    %1703 = vmatpush1.msra.mxu0 0.0
    %1704 = vmatprep.subr.mxu0 0.0
    %1705 = vmatpush1.msra.mxu0 0.0
    %1706 = vmatprep.subr.mxu0 0.0
    %1707 = vmatpush1.msra.mxu0 0.0
    %1708 = vmatprep.subr.mxu0 0.0
    %1709 = vmatpush1.msra.mxu0 0.0
    %1710 = vmatprep.subr.mxu0 0.0
    %1711 = vmatpush1.msra.mxu0 0.0
    %1712 = vmatprep.subr.mxu0 0.0
    %1713 = vmatpush1.msra.mxu0 0.0
    %1714 = vmatprep.subr.mxu0 0.0
    %1715 = vmatpush1.msra.mxu0 0.0
    %1716 = vmatprep.subr.mxu0 0.0
    %1717 = vmatpush1.msra.mxu0 0.0
    %1718 = vmatprep.subr.mxu0 0.0
    %1719 = vmatpush1.msra.mxu0 0.0
    %1720 = vmatprep.subr.mxu0 0.0
    %1721 = vmatpush1.msra.mxu0 0.0
    %1722 = vmatprep.subr.mxu0 0.0
    %1723 = vmatpush1.msra.mxu0 0.0
    %1724 = vmatprep.subr.mxu0 0.0
    %1725 = vmatpush1.msra.mxu0 0.0
    %1726 = vmatprep.subr.mxu0 0.0
    %1727 = vmatpush1.msra.mxu0 0.0
    %1728 = vmatprep.subr.mxu0 0.0
    %1729 = vmatpush1.msra.mxu0 0.0
    %1730 = vmatprep.subr.mxu0 0.0
    %1731 = vmatpush1.msra.mxu0 0.0
    %1732 = vmatprep.subr.mxu0 0.0
    %1733 = vmatpush1.msra.mxu0 0.0
    %1734 = vmatprep.subr.mxu0 0.0
    %1735 = vmatpush1.msra.mxu0 0.0
    %1736 = vmatprep.subr.mxu0 0.0
    %1737 = vmatpush1.msra.mxu0 0.0
    %1738 = vmatprep.subr.mxu0 0.0
    %1739 = vmatpush1.msra.mxu0 0.0
    %1740 = vmatprep.subr.mxu0 0.0
    %1741 = vmatpush1.msra.mxu0 0.0
    %1742 = vmatprep.subr.mxu0 0.0
    %1743 = vmatpush1.msra.mxu0 0.0
    %1744 = vmatprep.subr.mxu0 0.0
    %1745 = vmatpush1.msra.mxu0 0.0
    %1746 = vmatprep.subr.mxu0 0.0
    %1747 = vmatpush1.msra.mxu0 0.0
    %1748 = vmatprep.subr.mxu0 0.0
    %1749 = vmatpush1.msra.mxu0 0.0
    %1750 = vmatprep.subr.mxu0 0.0
    %1751 = vmatpush1.msra.mxu0 0.0
    %1752 = vmatprep.subr.mxu0 0.0
    %1753 = vmatpush1.msra.mxu0 0.0
    %1754 = vmatprep.subr.mxu0 0.0
    %1755 = vmatpush1.msra.mxu0 0.0
    %1756 = vmatprep.subr.mxu0 0.0
    %1757 = vmatpush1.msra.mxu0 0.0
    %1758 = vmatprep.subr.mxu0 0.0
    %1759 = vmatpush1.msra.mxu0 0.0
    %1760 = vmatprep.mubr.f32.mxu0 0.0
    %1761 = vmatmul.mubr.f32.gmra.mrb[0].mxu0 %v1692
    %v1762 = vpop.f32.mrb[0].mxu0
    %v1763 = vadd.f32 0.0, %v1762
    %v1764 = vpop.f32.mrb[0].mxu0
    %1765 = vmatprep.mubr.f32.mxu0 0.0
    %1766 = vmatmul.mubr.f32.gmra.mrb[0].mxu0 %v1694
    %v1767 = vpop.f32.mrb[0].mxu0
    %v1768 = vadd.f32 0.0, %v1767
    %v1769 = vpop.f32.mrb[0].mxu0
    %1770 = vdwg.mxu0
    %v1771 = vlaneseq
    %v1772 = vshrl.u32 %v1771, 7
    %v1773 = vsub.s32 3, %v1772
    %v1774 = vrot.slane %v1647, %v1773
    %v1775 = vmul.f32 %v1763, %v1774
    %v1776 = vmul.f32 %v1768, %v1774
    %v1777 = vsub.f32 %v1646, %v1775
    %v1778 = vsub.f32 %v1647, %v1776
    %v1779 = vlaneseq
    %v1780 = vshrl.u32 %v1779, 7
    %v1781 = vsub.s32 3, %v1780
    %v1782 = vrot.slane %v1667, %v1781
    %1784 = vrot.lane.b32.xlu0 %v1782, 88
    %v1785 = vpop.permute.xlu0 %1784
    %v1787 = vmul.f32 %v1684, %v1785
    %v1788 = vmul.f32 %v1685, %v1785
    %1791 = vrot.lane.b32.xlu0 %v1787, 40
    %v1792 = vpop.permute.xlu0 %1791
    %1793 = vrot.lane.b32.xlu0 %v1788, 40
    %v1794 = vpop.permute.xlu0 %1793
    %v1797 = vsub.f32 %v1666, %v1792
    %v1798 = vsub.f32 %v1667, %v1794
    %v1799 = vrcp.pop %v1778
    %v1800 = vmul.f32 %v1778, %v1799
    %v1801 = vsub.f32 2.0, %v1800
    %v1802 = vmul.f32 %v1799, %v1801
    %vm1803 = vcmp.eq.s32.totalorder %v41, 12
    %vm1804 = vcmp.eq.s32.totalorder %v42, 12
    %v1805 = vsel %vm1803, 1, 0
    %v1806 = vsel %vm1804, 1, 0
    %v1807 = vcvt.s32.f32 %v1805
    %v1808 = vcvt.s32.f32 %v1806
    %v1809 = vsub.f32 %v1777, %v1807
    %v1810 = vsub.f32 %v1778, %v1808
    %v1811 = vlaneseq
    %v1812 = vshrl.u32 %v1811, 7
    %v1813 = vsub.s32 4, %v1812
    %v1814 = vrot.slane %v1802, %v1813
    %v1815 = vmul.f32 %v1809, %v1814
    %v1816 = vmul.f32 %v1810, %v1814
    %1819 = vrot.lane.b32.xlu0 %v1815, 32
    %v1820 = vpop.permute.xlu0 %1819
    %1821 = vrot.lane.b32.xlu0 %v1816, 32
    %v1822 = vpop.permute.xlu0 %1821
    %v1823 = vsel %vm75, %v1820, 0
    %v1825 = vsel %vm75, %v1822, 0
    %1827 = vmatprep.subr.mxu0 0.0
    %1828 = vmatpush1.msra.mxu0 %v21
    %1829 = vmatprep.subr.mxu0 0.0
    %1830 = vmatpush1.msra.mxu0 0.0
    %1831 = vmatprep.subr.mxu0 0.0
    %1832 = vmatpush1.msra.mxu0 0.0
    %1833 = vmatprep.subr.mxu0 0.0
    %1834 = vmatpush1.msra.mxu0 0.0
    %1835 = vmatprep.subr.mxu0 0.0
    %1836 = vmatpush1.msra.mxu0 0.0
    %1837 = vmatprep.subr.mxu0 0.0
    %1838 = vmatpush1.msra.mxu0 0.0
    %1839 = vmatprep.subr.mxu0 0.0
    %1840 = vmatpush1.msra.mxu0 0.0
    %1841 = vmatprep.subr.mxu0 0.0
    %1842 = vmatpush1.msra.mxu0 0.0
    %1843 = vmatprep.subr.mxu0 0.0
    %1844 = vmatpush1.msra.mxu0 0.0
    %1845 = vmatprep.subr.mxu0 0.0
    %1846 = vmatpush1.msra.mxu0 0.0
    %1847 = vmatprep.subr.mxu0 0.0
    %1848 = vmatpush1.msra.mxu0 0.0
    %1849 = vmatprep.subr.mxu0 0.0
    %1850 = vmatpush1.msra.mxu0 0.0
    %1851 = vmatprep.subr.mxu0 0.0
    %1852 = vmatpush1.msra.mxu0 0.0
    %1853 = vmatprep.subr.mxu0 0.0
    %1854 = vmatpush1.msra.mxu0 0.0
    %1855 = vmatprep.subr.mxu0 0.0
    %1856 = vmatpush1.msra.mxu0 0.0
    %1857 = vmatprep.subr.mxu0 0.0
    %1858 = vmatpush1.msra.mxu0 0.0
    %1859 = vmatprep.subr.mxu0 0.0
    %1860 = vmatpush1.msra.mxu0 0.0
    %1861 = vmatprep.subr.mxu0 0.0
    %1862 = vmatpush1.msra.mxu0 0.0
    %1863 = vmatprep.subr.mxu0 0.0
    %1864 = vmatpush1.msra.mxu0 0.0
    %1865 = vmatprep.subr.mxu0 0.0
    %1866 = vmatpush1.msra.mxu0 0.0
    %1867 = vmatprep.subr.mxu0 0.0
    %1868 = vmatpush1.msra.mxu0 0.0
    %1869 = vmatprep.subr.mxu0 0.0
    %1870 = vmatpush1.msra.mxu0 0.0
    %1871 = vmatprep.subr.mxu0 0.0
    %1872 = vmatpush1.msra.mxu0 0.0
    %1873 = vmatprep.subr.mxu0 0.0
    %1874 = vmatpush1.msra.mxu0 0.0
    %1875 = vmatprep.subr.mxu0 0.0
    %1876 = vmatpush1.msra.mxu0 0.0
    %1877 = vmatprep.subr.mxu0 0.0
    %1878 = vmatpush1.msra.mxu0 0.0
    %1879 = vmatprep.subr.mxu0 0.0
    %1880 = vmatpush1.msra.mxu0 0.0
    %1881 = vmatprep.subr.mxu0 0.0
    %1882 = vmatpush1.msra.mxu0 0.0
    %1883 = vmatprep.subr.mxu0 0.0
    %1884 = vmatpush1.msra.mxu0 0.0
    %1885 = vmatprep.subr.mxu0 0.0
    %1886 = vmatpush1.msra.mxu0 0.0
    %1887 = vmatprep.subr.mxu0 0.0
    %1888 = vmatpush1.msra.mxu0 0.0
    %1889 = vmatprep.subr.mxu0 0.0
    %1890 = vmatpush1.msra.mxu0 0.0
    %1891 = vmatprep.mubr.f32.mxu0 0.0
    %1892 = vmatmul.mubr.f32.gmra.mrb[0].mxu0 %v1823
    %v1893 = vpop.f32.mrb[0].mxu0
    %v1894 = vadd.f32 0.0, %v1893
    %v1895 = vpop.f32.mrb[0].mxu0
    %1896 = vmatprep.mubr.f32.mxu0 0.0
    %1897 = vmatmul.mubr.f32.gmra.mrb[0].mxu0 %v1825
    %v1898 = vpop.f32.mrb[0].mxu0
    %v1899 = vadd.f32 0.0, %v1898
    %v1900 = vpop.f32.mrb[0].mxu0
    %1901 = vdwg.mxu0
    %v1902 = vlaneseq
    %v1903 = vshrl.u32 %v1902, 7
    %v1904 = vsub.s32 4, %v1903
    %v1905 = vrot.slane %v1778, %v1904
    %v1906 = vmul.f32 %v1894, %v1905
    %v1907 = vmul.f32 %v1899, %v1905
    %v1908 = vsub.f32 %v1777, %v1906
    %v1909 = vsub.f32 %v1778, %v1907
    %v1910 = vlaneseq
    %v1911 = vshrl.u32 %v1910, 7
    %v1912 = vsub.s32 4, %v1911
    %v1913 = vrot.slane %v1798, %v1912
    %1915 = vrot.lane.b32.xlu0 %v1913, 96
    %v1916 = vpop.permute.xlu0 %1915
    %v1918 = vmul.f32 %v1815, %v1916
    %v1919 = vmul.f32 %v1816, %v1916
    %1922 = vrot.lane.b32.xlu0 %v1918, 32
    %v1923 = vpop.permute.xlu0 %1922
    %1924 = vrot.lane.b32.xlu0 %v1919, 32
    %v1925 = vpop.permute.xlu0 %1924
    %v1928 = vsub.f32 %v1797, %v1923
    %v1929 = vsub.f32 %v1798, %v1925
    %v1930 = vrcp.pop %v1909
    %v1931 = vmul.f32 %v1909, %v1930
    %v1932 = vsub.f32 2.0, %v1931
    %v1933 = vmul.f32 %v1930, %v1932
    %vm1934 = vcmp.eq.s32.totalorder %v41, 13
    %vm1935 = vcmp.eq.s32.totalorder %v42, 13
    %v1936 = vsel %vm1934, 1, 0
    %v1937 = vsel %vm1935, 1, 0
    %v1938 = vcvt.s32.f32 %v1936
    %v1939 = vcvt.s32.f32 %v1937
    %v1940 = vsub.f32 %v1908, %v1938
    %v1941 = vsub.f32 %v1909, %v1939
    %v1942 = vlaneseq
    %v1943 = vshrl.u32 %v1942, 7
    %v1944 = vsub.s32 5, %v1943
    %v1945 = vrot.slane %v1933, %v1944
    %v1946 = vmul.f32 %v1940, %v1945
    %v1947 = vmul.f32 %v1941, %v1945
    %1950 = vrot.lane.b32.xlu0 %v1946, 24
    %v1951 = vpop.permute.xlu0 %1950
    %1952 = vrot.lane.b32.xlu0 %v1947, 24
    %v1953 = vpop.permute.xlu0 %1952
    %v1954 = vsel %vm75, %v1951, 0
    %v1956 = vsel %vm75, %v1953, 0
    %1958 = vmatprep.subr.mxu0 0.0
    %1959 = vmatpush1.msra.mxu0 %v21
    %1960 = vmatprep.subr.mxu0 0.0
    %1961 = vmatpush1.msra.mxu0 0.0
    %1962 = vmatprep.subr.mxu0 0.0
    %1963 = vmatpush1.msra.mxu0 0.0
    %1964 = vmatprep.subr.mxu0 0.0
    %1965 = vmatpush1.msra.mxu0 0.0
    %1966 = vmatprep.subr.mxu0 0.0
    %1967 = vmatpush1.msra.mxu0 0.0
    %1968 = vmatprep.subr.mxu0 0.0
    %1969 = vmatpush1.msra.mxu0 0.0
    %1970 = vmatprep.subr.mxu0 0.0
    %1971 = vmatpush1.msra.mxu0 0.0
    %1972 = vmatprep.subr.mxu0 0.0
    %1973 = vmatpush1.msra.mxu0 0.0
    %1974 = vmatprep.subr.mxu0 0.0
    %1975 = vmatpush1.msra.mxu0 0.0
    %1976 = vmatprep.subr.mxu0 0.0
    %1977 = vmatpush1.msra.mxu0 0.0
    %1978 = vmatprep.subr.mxu0 0.0
    %1979 = vmatpush1.msra.mxu0 0.0
    %1980 = vmatprep.subr.mxu0 0.0
    %1981 = vmatpush1.msra.mxu0 0.0
    %1982 = vmatprep.subr.mxu0 0.0
    %1983 = vmatpush1.msra.mxu0 0.0
    %1984 = vmatprep.subr.mxu0 0.0
    %1985 = vmatpush1.msra.mxu0 0.0
    %1986 = vmatprep.subr.mxu0 0.0
    %1987 = vmatpush1.msra.mxu0 0.0
    %1988 = vmatprep.subr.mxu0 0.0
    %1989 = vmatpush1.msra.mxu0 0.0
    %1990 = vmatprep.subr.mxu0 0.0
    %1991 = vmatpush1.msra.mxu0 0.0
    %1992 = vmatprep.subr.mxu0 0.0
    %1993 = vmatpush1.msra.mxu0 0.0
    %1994 = vmatprep.subr.mxu0 0.0
    %1995 = vmatpush1.msra.mxu0 0.0
    %1996 = vmatprep.subr.mxu0 0.0
    %1997 = vmatpush1.msra.mxu0 0.0
    %1998 = vmatprep.subr.mxu0 0.0
    %1999 = vmatpush1.msra.mxu0 0.0
    %2000 = vmatprep.subr.mxu0 0.0
    %2001 = vmatpush1.msra.mxu0 0.0
    %2002 = vmatprep.subr.mxu0 0.0
    %2003 = vmatpush1.msra.mxu0 0.0
    %2004 = vmatprep.subr.mxu0 0.0
    %2005 = vmatpush1.msra.mxu0 0.0
    %2006 = vmatprep.subr.mxu0 0.0
    %2007 = vmatpush1.msra.mxu0 0.0
    %2008 = vmatprep.subr.mxu0 0.0
    %2009 = vmatpush1.msra.mxu0 0.0
    %2010 = vmatprep.subr.mxu0 0.0
    %2011 = vmatpush1.msra.mxu0 0.0
    %2012 = vmatprep.subr.mxu0 0.0
    %2013 = vmatpush1.msra.mxu0 0.0
    %2014 = vmatprep.subr.mxu0 0.0
    %2015 = vmatpush1.msra.mxu0 0.0
    %2016 = vmatprep.subr.mxu0 0.0
    %2017 = vmatpush1.msra.mxu0 0.0
    %2018 = vmatprep.subr.mxu0 0.0
    %2019 = vmatpush1.msra.mxu0 0.0
    %2020 = vmatprep.subr.mxu0 0.0
    %2021 = vmatpush1.msra.mxu0 0.0
    %2022 = vmatprep.mubr.f32.mxu0 0.0
    %2023 = vmatmul.mubr.f32.gmra.mrb[0].mxu0 %v1954
    %v2024 = vpop.f32.mrb[0].mxu0
    %v2025 = vadd.f32 0.0, %v2024
    %v2026 = vpop.f32.mrb[0].mxu0
    %2027 = vmatprep.mubr.f32.mxu0 0.0
    %2028 = vmatmul.mubr.f32.gmra.mrb[0].mxu0 %v1956
    %v2029 = vpop.f32.mrb[0].mxu0
    %v2030 = vadd.f32 0.0, %v2029
    %v2031 = vpop.f32.mrb[0].mxu0
    %2032 = vdwg.mxu0
    %v2033 = vlaneseq
    %v2034 = vshrl.u32 %v2033, 7
    %v2035 = vsub.s32 5, %v2034
    %v2036 = vrot.slane %v1909, %v2035
    %v2037 = vmul.f32 %v2025, %v2036
    %v2038 = vmul.f32 %v2030, %v2036
    %v2039 = vsub.f32 %v1908, %v2037
    %v2040 = vsub.f32 %v1909, %v2038
    %v2041 = vlaneseq
    %v2042 = vshrl.u32 %v2041, 7
    %v2043 = vsub.s32 5, %v2042
    %v2044 = vrot.slane %v1929, %v2043
    %2046 = vrot.lane.b32.xlu0 %v2044, 104
    %v2047 = vpop.permute.xlu0 %2046
    %v2049 = vmul.f32 %v1946, %v2047
    %v2050 = vmul.f32 %v1947, %v2047
    %2053 = vrot.lane.b32.xlu0 %v2049, 24
    %v2054 = vpop.permute.xlu0 %2053
    %2055 = vrot.lane.b32.xlu0 %v2050, 24
    %v2056 = vpop.permute.xlu0 %2055
    %v2059 = vsub.f32 %v1928, %v2054
    %v2060 = vsub.f32 %v1929, %v2056
    %v2061 = vrcp.pop %v2040
    %v2062 = vmul.f32 %v2040, %v2061
    %v2063 = vsub.f32 2.0, %v2062
    %v2064 = vmul.f32 %v2061, %v2063
    %vm2065 = vcmp.eq.s32.totalorder %v41, 14
    %vm2066 = vcmp.eq.s32.totalorder %v42, 14
    %v2067 = vsel %vm2065, 1, 0
    %v2068 = vsel %vm2066, 1, 0
    %v2069 = vcvt.s32.f32 %v2067
    %v2070 = vcvt.s32.f32 %v2068
    %v2071 = vsub.f32 %v2039, %v2069
    %v2072 = vsub.f32 %v2040, %v2070
    %v2073 = vlaneseq
    %v2074 = vshrl.u32 %v2073, 7
    %v2075 = vsub.s32 6, %v2074
    %v2076 = vrot.slane %v2064, %v2075
    %v2077 = vmul.f32 %v2071, %v2076
    %v2078 = vmul.f32 %v2072, %v2076
    %2081 = vrot.lane.b32.xlu0 %v2077, 16
    %v2082 = vpop.permute.xlu0 %2081
    %2083 = vrot.lane.b32.xlu0 %v2078, 16
    %v2084 = vpop.permute.xlu0 %2083
    %v2085 = vsel %vm75, %v2082, 0
    %v2087 = vsel %vm75, %v2084, 0
    %2089 = vmatprep.subr.mxu0 0.0
    %2090 = vmatpush1.msra.mxu0 %v21
    %2091 = vmatprep.subr.mxu0 0.0
    %2092 = vmatpush1.msra.mxu0 0.0
    %2093 = vmatprep.subr.mxu0 0.0
    %2094 = vmatpush1.msra.mxu0 0.0
    %2095 = vmatprep.subr.mxu0 0.0
    %2096 = vmatpush1.msra.mxu0 0.0
    %2097 = vmatprep.subr.mxu0 0.0
    %2098 = vmatpush1.msra.mxu0 0.0
    %2099 = vmatprep.subr.mxu0 0.0
    %2100 = vmatpush1.msra.mxu0 0.0
    %2101 = vmatprep.subr.mxu0 0.0
    %2102 = vmatpush1.msra.mxu0 0.0
    %2103 = vmatprep.subr.mxu0 0.0
    %2104 = vmatpush1.msra.mxu0 0.0
    %2105 = vmatprep.subr.mxu0 0.0
    %2106 = vmatpush1.msra.mxu0 0.0
    %2107 = vmatprep.subr.mxu0 0.0
    %2108 = vmatpush1.msra.mxu0 0.0
    %2109 = vmatprep.subr.mxu0 0.0
    %2110 = vmatpush1.msra.mxu0 0.0
    %2111 = vmatprep.subr.mxu0 0.0
    %2112 = vmatpush1.msra.mxu0 0.0
    %2113 = vmatprep.subr.mxu0 0.0
    %2114 = vmatpush1.msra.mxu0 0.0
    %2115 = vmatprep.subr.mxu0 0.0
    %2116 = vmatpush1.msra.mxu0 0.0
    %2117 = vmatprep.subr.mxu0 0.0
    %2118 = vmatpush1.msra.mxu0 0.0
    %2119 = vmatprep.subr.mxu0 0.0
    %2120 = vmatpush1.msra.mxu0 0.0
    %2121 = vmatprep.subr.mxu0 0.0
    %2122 = vmatpush1.msra.mxu0 0.0
    %2123 = vmatprep.subr.mxu0 0.0
    %2124 = vmatpush1.msra.mxu0 0.0
    %2125 = vmatprep.subr.mxu0 0.0
    %2126 = vmatpush1.msra.mxu0 0.0
    %2127 = vmatprep.subr.mxu0 0.0
    %2128 = vmatpush1.msra.mxu0 0.0
    %2129 = vmatprep.subr.mxu0 0.0
    %2130 = vmatpush1.msra.mxu0 0.0
    %2131 = vmatprep.subr.mxu0 0.0
    %2132 = vmatpush1.msra.mxu0 0.0
    %2133 = vmatprep.subr.mxu0 0.0
    %2134 = vmatpush1.msra.mxu0 0.0
    %2135 = vmatprep.subr.mxu0 0.0
    %2136 = vmatpush1.msra.mxu0 0.0
    %2137 = vmatprep.subr.mxu0 0.0
    %2138 = vmatpush1.msra.mxu0 0.0
    %2139 = vmatprep.subr.mxu0 0.0
    %2140 = vmatpush1.msra.mxu0 0.0
    %2141 = vmatprep.subr.mxu0 0.0
    %2142 = vmatpush1.msra.mxu0 0.0
    %2143 = vmatprep.subr.mxu0 0.0
    %2144 = vmatpush1.msra.mxu0 0.0
    %2145 = vmatprep.subr.mxu0 0.0
    %2146 = vmatpush1.msra.mxu0 0.0
    %2147 = vmatprep.subr.mxu0 0.0
    %2148 = vmatpush1.msra.mxu0 0.0
    %2149 = vmatprep.subr.mxu0 0.0
    %2150 = vmatpush1.msra.mxu0 0.0
    %2151 = vmatprep.subr.mxu0 0.0
    %2152 = vmatpush1.msra.mxu0 0.0
    %2153 = vmatprep.mubr.f32.mxu0 0.0
    %2154 = vmatmul.mubr.f32.gmra.mrb[0].mxu0 %v2085
    %v2155 = vpop.f32.mrb[0].mxu0
    %v2156 = vadd.f32 0.0, %v2155
    %v2157 = vpop.f32.mrb[0].mxu0
    %2158 = vmatprep.mubr.f32.mxu0 0.0
    %2159 = vmatmul.mubr.f32.gmra.mrb[0].mxu0 %v2087
    %v2160 = vpop.f32.mrb[0].mxu0
    %v2161 = vadd.f32 0.0, %v2160
    %v2162 = vpop.f32.mrb[0].mxu0
    %2163 = vdwg.mxu0
    %v2164 = vlaneseq
    %v2165 = vshrl.u32 %v2164, 7
    %v2166 = vsub.s32 6, %v2165
    %v2167 = vrot.slane %v2040, %v2166
    %v2168 = vmul.f32 %v2156, %v2167
    %v2169 = vmul.f32 %v2161, %v2167
    %v2170 = vsub.f32 %v2039, %v2168
    %v2171 = vsub.f32 %v2040, %v2169
    %v2172 = vlaneseq
    %v2173 = vshrl.u32 %v2172, 7
    %v2174 = vsub.s32 6, %v2173
    %v2175 = vrot.slane %v2060, %v2174
    %2177 = vrot.lane.b32.xlu0 %v2175, 112
    %v2178 = vpop.permute.xlu0 %2177
    %v2180 = vmul.f32 %v2077, %v2178
    %v2181 = vmul.f32 %v2078, %v2178
    %2184 = vrot.lane.b32.xlu0 %v2180, 16
    %v2185 = vpop.permute.xlu0 %2184
    %2186 = vrot.lane.b32.xlu0 %v2181, 16
    %v2187 = vpop.permute.xlu0 %2186
    %v2190 = vsub.f32 %v2059, %v2185
    %v2191 = vsub.f32 %v2060, %v2187
    %v2192 = vrcp.pop %v2171
    %v2193 = vmul.f32 %v2171, %v2192
    %v2194 = vsub.f32 2.0, %v2193
    %v2195 = vmul.f32 %v2192, %v2194
    %vm2196 = vcmp.eq.s32.totalorder %v41, 15
    %vm2197 = vcmp.eq.s32.totalorder %v42, 15
    %v2198 = vsel %vm2196, 1, 0
    %v2199 = vsel %vm2197, 1, 0
    %v2200 = vcvt.s32.f32 %v2198
    %v2201 = vcvt.s32.f32 %v2199
    %v2202 = vsub.f32 %v2170, %v2200
    %v2203 = vsub.f32 %v2171, %v2201
    %v2204 = vlaneseq
    %v2205 = vshrl.u32 %v2204, 7
    %v2206 = vsub.s32 7, %v2205
    %v2207 = vrot.slane %v2195, %v2206
    %v2208 = vmul.f32 %v2202, %v2207
    %v2209 = vmul.f32 %v2203, %v2207
    %v2210 = vlaneseq
    %v2211 = vshrl.u32 %v2210, 7
    %v2212 = vsub.s32 7, %v2211
    %v2213 = vrot.slane %v2191, %v2212
    %2215 = vrot.lane.b32.xlu0 %v2213, 120
    %v2216 = vpop.permute.xlu0 %2215
    %v2218 = vmul.f32 %v2208, %v2216
    %v2219 = vmul.f32 %v2209, %v2216
    %2222 = vrot.lane.b32.xlu0 %v2218, 8
    %v2223 = vpop.permute.xlu0 %2222
    %2224 = vrot.lane.b32.xlu0 %v2219, 8
    %v2225 = vpop.permute.xlu0 %2224
    %v2228 = vsub.f32 %v2190, %v2223
    %v2229 = vsub.f32 %v2191, %v2225
    %vm2230 = vcmp.ge.f32.partialorder %v2228, 0.0
    %vm2231 = vcmp.ge.f32.partialorder %v2229, 0.0
    %v2232 = vmul.f32 %v2228, 0.01
    %v2233 = vmul.f32 %v2229, 0.01
    %v2234 = vsel %vm2230, %v2228, %v2232
    %v2235 = vsel %vm2231, %v2229, %v2233
    %v2237 = vsel %vm75, %v2234, 0
    %v2240 = vsel %vm75, %v2235, 0
    %2242 = vmatprep.subr.mxu0 0.0
    %2243 = vmatpush1.msra.mxu0 %v21
    %2244 = vmatprep.subr.mxu0 0.0
    %2245 = vmatpush1.msra.mxu0 0.0
    %2246 = vmatprep.subr.mxu0 0.0
    %2247 = vmatpush1.msra.mxu0 0.0
    %2248 = vmatprep.subr.mxu0 0.0
    %2249 = vmatpush1.msra.mxu0 0.0
    %2250 = vmatprep.subr.mxu0 0.0
    %2251 = vmatpush1.msra.mxu0 0.0
    %2252 = vmatprep.subr.mxu0 0.0
    %2253 = vmatpush1.msra.mxu0 0.0
    %2254 = vmatprep.subr.mxu0 0.0
    %2255 = vmatpush1.msra.mxu0 0.0
    %2256 = vmatprep.subr.mxu0 0.0
    %2257 = vmatpush1.msra.mxu0 0.0
    %2258 = vmatprep.subr.mxu0 0.0
    %2259 = vmatpush1.msra.mxu0 0.0
    %2260 = vmatprep.subr.mxu0 0.0
    %2261 = vmatpush1.msra.mxu0 0.0
    %2262 = vmatprep.subr.mxu0 0.0
    %2263 = vmatpush1.msra.mxu0 0.0
    %2264 = vmatprep.subr.mxu0 0.0
    %2265 = vmatpush1.msra.mxu0 0.0
    %2266 = vmatprep.subr.mxu0 0.0
    %2267 = vmatpush1.msra.mxu0 0.0
    %2268 = vmatprep.subr.mxu0 0.0
    %2269 = vmatpush1.msra.mxu0 0.0
    %2270 = vmatprep.subr.mxu0 0.0
    %2271 = vmatpush1.msra.mxu0 0.0
    %2272 = vmatprep.subr.mxu0 0.0
    %2273 = vmatpush1.msra.mxu0 0.0
    %2274 = vmatprep.subr.mxu0 0.0
    %2275 = vmatpush1.msra.mxu0 0.0
    %2276 = vmatprep.subr.mxu0 0.0
    %2277 = vmatpush1.msra.mxu0 0.0
    %2278 = vmatprep.subr.mxu0 0.0
    %2279 = vmatpush1.msra.mxu0 0.0
    %2280 = vmatprep.subr.mxu0 0.0
    %2281 = vmatpush1.msra.mxu0 0.0
    %2282 = vmatprep.subr.mxu0 0.0
    %2283 = vmatpush1.msra.mxu0 0.0
    %2284 = vmatprep.subr.mxu0 0.0
    %2285 = vmatpush1.msra.mxu0 0.0
    %2286 = vmatprep.subr.mxu0 0.0
    %2287 = vmatpush1.msra.mxu0 0.0
    %2288 = vmatprep.subr.mxu0 0.0
    %2289 = vmatpush1.msra.mxu0 0.0
    %2290 = vmatprep.subr.mxu0 0.0
    %2291 = vmatpush1.msra.mxu0 0.0
    %2292 = vmatprep.subr.mxu0 0.0
    %2293 = vmatpush1.msra.mxu0 0.0
    %2294 = vmatprep.subr.mxu0 0.0
    %2295 = vmatpush1.msra.mxu0 0.0
    %2296 = vmatprep.subr.mxu0 0.0
    %2297 = vmatpush1.msra.mxu0 0.0
    %2298 = vmatprep.subr.mxu0 0.0
    %2299 = vmatpush1.msra.mxu0 0.0
    %2300 = vmatprep.subr.mxu0 0.0
    %2301 = vmatpush1.msra.mxu0 0.0
    %2302 = vmatprep.subr.mxu0 0.0
    %2303 = vmatpush1.msra.mxu0 0.0
    %2304 = vmatprep.subr.mxu0 0.0
    %2305 = vmatpush1.msra.mxu0 0.0
    %2306 = vmatprep.mubr.f32.mxu0 0.0
    %2307 = vmatmul.mubr.f32.gmra.mrb[0].mxu0 %v2237
    %v2308 = vpop.f32.mrb[0].mxu0
    %v2309 = vadd.f32 0.0, %v2308
    %v2310 = vpop.f32.mrb[0].mxu0
    %2311 = vmatprep.mubr.f32.mxu0 0.0
    %2312 = vmatmul.mubr.f32.gmra.mrb[0].mxu0 %v2240
    %v2313 = vpop.f32.mrb[0].mxu0
    %v2314 = vadd.f32 0.0, %v2313
    %v2315 = vpop.f32.mrb[0].mxu0
    %2316 = vdwg.mxu0
    %v2317 = vmul.f32 %v55, %v2309
    %v2318 = vmul.f32 %v56, %v2314
    %v2320 = vsel %vm157, 1.0, 0
    %2322 = vmatprep.subr.mxu0 0.0
    %2323 = vmatpush1.msra.mxu0 %v2317
    %2324 = vmatprep.subr.mxu0 0.0
    %2325 = vmatpush1.msra.mxu0 %v2318
    %2326 = vmatprep.subr.mxu0 0.0
    %2327 = vmatpush1.msra.mxu0 0.0
    %2328 = vmatprep.subr.mxu0 0.0
    %2329 = vmatpush1.msra.mxu0 0.0
    %2330 = vmatprep.subr.mxu0 0.0
    %2331 = vmatpush1.msra.mxu0 0.0
    %2332 = vmatprep.subr.mxu0 0.0
    %2333 = vmatpush1.msra.mxu0 0.0
    %2334 = vmatprep.subr.mxu0 0.0
    %2335 = vmatpush1.msra.mxu0 0.0
    %2336 = vmatprep.subr.mxu0 0.0
    %2337 = vmatpush1.msra.mxu0 0.0
    %2338 = vmatprep.subr.mxu0 0.0
    %2339 = vmatpush1.msra.mxu0 0.0
    %2340 = vmatprep.subr.mxu0 0.0
    %2341 = vmatpush1.msra.mxu0 0.0
    %2342 = vmatprep.subr.mxu0 0.0
    %2343 = vmatpush1.msra.mxu0 0.0
    %2344 = vmatprep.subr.mxu0 0.0
    %2345 = vmatpush1.msra.mxu0 0.0
    %2346 = vmatprep.subr.mxu0 0.0
    %2347 = vmatpush1.msra.mxu0 0.0
    %2348 = vmatprep.subr.mxu0 0.0
    %2349 = vmatpush1.msra.mxu0 0.0
    %2350 = vmatprep.subr.mxu0 0.0
    %2351 = vmatpush1.msra.mxu0 0.0
    %2352 = vmatprep.subr.mxu0 0.0
    %2353 = vmatpush1.msra.mxu0 0.0
    %2354 = vmatprep.subr.mxu0 0.0
    %2355 = vmatpush1.msra.mxu0 0.0
    %2356 = vmatprep.subr.mxu0 0.0
    %2357 = vmatpush1.msra.mxu0 0.0
    %2358 = vmatprep.subr.mxu0 0.0
    %2359 = vmatpush1.msra.mxu0 0.0
    %2360 = vmatprep.subr.mxu0 0.0
    %2361 = vmatpush1.msra.mxu0 0.0
    %2362 = vmatprep.subr.mxu0 0.0
    %2363 = vmatpush1.msra.mxu0 0.0
    %2364 = vmatprep.subr.mxu0 0.0
    %2365 = vmatpush1.msra.mxu0 0.0
    %2366 = vmatprep.subr.mxu0 0.0
    %2367 = vmatpush1.msra.mxu0 0.0
    %2368 = vmatprep.subr.mxu0 0.0
    %2369 = vmatpush1.msra.mxu0 0.0
    %2370 = vmatprep.subr.mxu0 0.0
    %2371 = vmatpush1.msra.mxu0 0.0
    %2372 = vmatprep.subr.mxu0 0.0
    %2373 = vmatpush1.msra.mxu0 0.0
    %2374 = vmatprep.subr.mxu0 0.0
    %2375 = vmatpush1.msra.mxu0 0.0
    %2376 = vmatprep.subr.mxu0 0.0
    %2377 = vmatpush1.msra.mxu0 0.0
    %2378 = vmatprep.subr.mxu0 0.0
    %2379 = vmatpush1.msra.mxu0 0.0
    %2380 = vmatprep.subr.mxu0 0.0
    %2381 = vmatpush1.msra.mxu0 0.0
    %2382 = vmatprep.subr.mxu0 0.0
    %2383 = vmatpush1.msra.mxu0 0.0
    %2384 = vmatprep.subr.mxu0 0.0
    %2385 = vmatpush1.msra.mxu0 0.0
    %2386 = vmatprep.mubr.f32.mxu0 0.0
    %2387 = vmatmul.mubr.f32.gmra.mrb[0].mxu0 %v2320
    %v2388 = vpop.f32.mrb[0].mxu0
    %v2389 = vadd.f32 0.0, %v2388
    %v2390 = vpop.f32.mrb[0].mxu0
    %2391 = vdwg.mxu0
    %2392 = vst [vmem:[#allocation2] sm:$0x1] %v2389
    // Predicated region
    $region22: #{tpu_custom_call.1} parent=1 // pred_check
      _
    $region23: #{tpu_custom_call.1} parent=1 // pred_check_branch
      %2394 = sbr.rel (0) target = $region25
    $region24: #{tpu_custom_call.1} parent=1 // pred_region
      %s2396 = ssub.s32 16, 16
      %2397 = vsyncadd [#allocation3], %s2396
      %s2399 = sshll.u32 [#allocation2], 4
      %s2400 = int_to_ptr.vmem [resolvable:$true] %s2399
      %2402 = dma.vmem_to_hbm [thread:$0]  %s2400, 16, %s5, [#allocation3]
    $region25: #{tpu_custom_call.1} parent=1 // pred_fallthru
      _
    // Predicated region
    $region26: #{tpu_custom_call.1} parent=1 // pred_check
      _
    $region27: #{tpu_custom_call.1} parent=1 // pred_check_branch
      %2404 = sbr.rel (0) target = $region29
    $region28: #{tpu_custom_call.1} parent=1 // pred_region
      %2405 = dma.done [#allocation3], 16
    $region29: #{tpu_custom_call.1} parent=1 // pred_fallthru
      _
    %2406 = vsyncpa [#allocation3], 1

</llo_original>
